<compile_context>
chip_gen: v7x
topology: tpu7x:2x2x1
jax: 0.10.0
libtpu: 0.0.40
codegen_flags: <defaults>
</compile_context>

<pallas_src>
import jax
import jax.numpy as jnp
from jax import lax
from jax.experimental import pallas as pl
from jax.experimental.pallas import tpu as pltpu

EPS = 1e-12  # BERT layer_norm_eps


# --------------------------------------------------------------------------
# Pallas kernel: BERT encoder stack + sum of the last two layer outputs
# --------------------------------------------------------------------------
def _make_encoder_kernel(num_heads, block_b):
    nh = num_heads
    bt = block_b

    def kernel(x_ref,                       # (Bt, S, H)  embeddings
               wqkv_ref, bqkv_ref,          # (H, 3H), (1, 3H)   (Q pre-scaled)
               wao_ref,                     # (H, H)
               wi_ref, bi_ref,              # (H, FF), (1, FF)
               wo_ref,                      # (FF, H)
               vecs_ref,                    # (8, H): bao,bo,ln1g,ln1b,ln2g,ln2b,0,0
               out_ref,                     # (Bt, S, H)  sum(last two)
               h_ref):                      # (Bt*S, H)   VMEM f32 carry
        layer = pl.program_id(1)
        n_layers = pl.num_programs(1)
        _, S, H = x_ref.shape
        M = bt * S
        dh = H // nh

        # Layer 0 of each batch block: seed the resident state.
        @pl.when(layer == 0)
        def _():
            for b in range(bt):
                h_ref[b * S:(b + 1) * S, :] = x_ref[b].astype(jnp.float32)

        h = h_ref[...]                                    # (M, H) f32

        bao = vecs_ref[0:1, :]
        bo = vecs_ref[1:2, :]
        ln1g = vecs_ref[2:3, :]
        ln1b = vecs_ref[3:4, :]
        ln2g = vecs_ref[4:5, :]
        ln2b = vecs_ref[5:6, :]

        def mm(a_f32, w_bf16):                            # bf16 MXU, f32 acc
            return jnp.dot(a_f32.astype(jnp.bfloat16), w_bf16,
                           preferred_element_type=jnp.float32)

        def layer_norm(v, gamma, beta):                   # f32, reuse (v - mu)
            mu = jnp.mean(v, axis=-1, keepdims=True)
            c = v - mu
            var = jnp.mean(c * c, axis=-1, keepdims=True)
            return c * lax.rsqrt(var + EPS) * gamma + beta

        # ---- multi-head self-attention (fused QKV, head-batched matmuls) ----
        # 1/sqrt(dh) is already folded into the Q columns of wqkv (wrapper).
        qkv = mm(h, wqkv_ref[...]) + bqkv_ref[...]        # (M, 3H) f32
        qkv_bf = qkv.astype(jnp.bfloat16)

        def gather_heads(col0):
            # (Bt*nh, S, dh) bf16 -- cheap static slices/stack, no transposes.
            parts = []
            for b in range(bt):
                for hd in range(nh):
                    parts.append(qkv_bf[b * S:(b + 1) * S,
                                        col0 + hd * dh:col0 + (hd + 1) * dh])
            return jnp.stack(parts, axis=0)

        q = gather_heads(0)
        k = gather_heads(H)
        v = gather_heads(2 * H)

        # batched over all (Bt*nh) heads: one wide MXU pass, no per-head k.T
        s = jnp.einsum('hqd,hkd->hqk', q, k,
                       preferred_element_type=jnp.float32)        # (Bt*nh,S,S)
        s = s - jnp.max(s, axis=-1, keepdims=True)
        p = jnp.exp(s)
        p = p * pl.reciprocal(jnp.sum(p, axis=-1, keepdims=True), approx=True)
        ctx = jnp.einsum('hqk,hkd->hqd', p.astype(jnp.bfloat16), v,
                         preferred_element_type=jnp.float32)      # (Bt*nh,S,dh)

        # reassemble (M, H): heads along lanes, batch rows along sublanes
        ctx2d = jnp.concatenate(
            [jnp.concatenate([ctx[b * nh + hd] for hd in range(nh)], axis=-1)
             for b in range(bt)], axis=0)

        attn = mm(ctx2d, wao_ref[...]) + bao
        h1 = layer_norm(h + attn, ln1g, ln1b)

        # ---- feed-forward ----
        inter = jax.nn.gelu(mm(h1, wi_ref[...]) + bi_ref[...], approximate=True)
        ffn = mm(inter, wo_ref[...]) + bo
        h2 = layer_norm(h1 + ffn, ln2g, ln2b)

        h_ref[...] = h2                                   # carry to next layer

        # hidden_states[-2] + hidden_states[-1]
        @pl.when(layer == n_layers - 2)
        def _():
            for b in range(bt):
                out_ref[b] = h2[b * S:(b + 1) * S, :].astype(out_ref.dtype)

        @pl.when(layer == n_layers - 1)
        def _():
            for b in range(bt):
                out_ref[b] = (out_ref[b]
                              + h2[b * S:(b + 1) * S, :].astype(out_ref.dtype))

    return kernel


def _vmem_limit_bytes(S, H, FF, Bt, nh):
    """Size the scoped-VMEM budget from the real config (with headroom)."""
    M = Bt * S
    per_layer = (2 * (H * 3 * H + H * H + H * FF + FF * H)   # bf16 weights
                 + 4 * (3 * H + FF + 8 * H))                  # f32 vectors
    streamed = 2 * per_layer                                  # double-buffered
    state = 4 * 3 * M * H                                     # in/out blocks + carry
    acts = 4 * M * (7 * H + FF) + 10 * Bt * nh * S * S        # qkv/inter/scores
    limit = int(1.5 * (streamed + state + acts)) + (8 << 20)
    return min(max(limit, 32 << 20), 64 << 20)                # v7x-safe cap


def bert_encoder_last2_sum(h0, layer_params, num_heads, block_b=None):
    """h0: (B, S, H) f32 embedding output -> (B, S, H) f32 sum of last 2 layers."""
    (wqkv, bqkv, wao, bao, ln1g, ln1b, wi, bi, wo, bo, ln2g, ln2b) = layer_params
    L, H, _ = wqkv.shape
    B, S, _ = h0.shape
    FF = wi.shape[-1]
    dh = H // num_heads
    assert L >= 2, "need at least two encoder layers for hidden_states[-2]"

    # Block Bt batch rows per grid step: amortizes each ~per-layer weight fetch
    # over Bt sequences and raises the matmul M dimension.
    if block_b is None:
        block_b = next(bt for bt in range(min(B, 4), 0, -1) if B % bt == 0)
    Bt = block_b
    assert B % Bt == 0

    # Fold the 1/sqrt(dh) attention scale into the Q projection (free, once).
    scale = 1.0 / float(dh) ** 0.5
    col_scale = jnp.concatenate([jnp.full((H,), scale, jnp.float32),
                                 jnp.ones((2 * H,), jnp.float32)])
    wqkv_s = (wqkv.astype(jnp.float32) * col_scale).astype(jnp.bfloat16)
    bqkv_s = bqkv.astype(jnp.float32) * col_scale

    # Pack the six width-H per-layer vectors into one (L, 8, H) stream.
    zeros = jnp.zeros((L, H), jnp.float32)
    vecs = jnp.stack([bao[:, 0, :], bo[:, 0, :],
                      ln1g[:, 0, :], ln1b[:, 0, :],
                      ln2g[:, 0, :], ln2b[:, 0, :],
                      zeros, zeros], axis=1).astype(jnp.float32)

    wao_b = wao.astype(jnp.bfloat16)
    wi_b = wi.astype(jnp.bfloat16)
    wo_b = wo.astype(jnp.bfloat16)
    bi_f = bi.astype(jnp.float32)

    state_spec = pl.BlockSpec((Bt, S, H), lambda b, l: (b, 0, 0))

    def per_layer(*tail):   # squeezed leading layer dim -> 2-D tile in kernel
        return pl.BlockSpec((None,) + tuple(tail),
                            lambda b, l: (l,) + (0,) * len(tail))

    grid_spec = pltpu.PrefetchScalarGridSpec(
        num_scalar_prefetch=0,
        grid=(B // Bt, L),
        in_specs=[
            state_spec,                    # h0 block
            per_layer(H, 3 * H),           # fused QKV weights (Q pre-scaled)
            per_layer(1, 3 * H),           # fused QKV bias
            per_layer(H, H),               # attention output dense W
            per_layer(H, FF),              # intermediate dense W
            per_layer(1, FF),              # intermediate dense b
            per_layer(FF, H),              # output dense W
            per_layer(8, H),               # packed bao/bo/ln1/ln2 vectors
        ],
        out_specs=state_spec,
        scratch_shapes=[pltpu.VMEM((Bt * S, H), jnp.float32)],
    )

    return pl.pallas_call(
        _make_encoder_kernel(num_heads, Bt),
        out_shape=jax.ShapeDtypeStruct((B, S, H), jnp.float32),
        grid_spec=grid_spec,
        compiler_params=pltpu.CompilerParams(
            dimension_semantics=("parallel", "arbitrary"),
            vmem_limit_bytes=_vmem_limit_bytes(S, H, FF, Bt, num_heads)),
    )(h0, wqkv_s, bqkv_s, wao_b, wi_b, bi_f, wo_b, vecs)


# --------------------------------------------------------------------------
# Embeddings (plain JAX: data-dependent gather) + full-module wrapper
# --------------------------------------------------------------------------
def bert_embed(ids, word_emb, pos_emb, type_emb, ln_g, ln_b):
    S = ids.shape[1]
    h = word_emb[ids] + pos_emb[None, :S, :] + type_emb[0][None, None, :]
    mu = h.mean(-1, keepdims=True)
    c = h - mu
    var = (c * c).mean(-1, keepdims=True)
    return c / jnp.sqrt(var + EPS) * ln_g + ln_b


def bert_mid_layer(ids, emb_params, layer_params, num_heads):
    h0 = bert_embed(ids, *emb_params)
    return bert_encoder_last2_sum(h0, layer_params, num_heads)


# --------------------------------------------------------------------------
# Pure-JAX reference (same bf16-at-the-matmul-boundary math)
# --------------------------------------------------------------------------
def reference(ids, emb_params, layer_params, num_heads):
    (wqkv, bqkv, wao, bao, ln1g, ln1b, wi, bi, wo, bo, ln2g, ln2b) = layer_params
    h = bert_embed(ids, *emb_params).astype(jnp.float32)
    L, H, _ = wqkv.shape
    B, S, _ = h.shape
    nh = num_heads
    dh = H // nh
    scale = 1.0 / float(dh) ** 0.5
    bf = jnp.bfloat16

    def mm(a, w):
        return jnp.dot(a.astype(bf), w.astype(bf),
                       preferred_element_type=jnp.float32)

    def ln(v, gamma, beta):
        mu = v.mean(-1, keepdims=True)
        c = v - mu
        var = (c * c).mean(-1, keepdims=True)
        return c / jnp.sqrt(var + EPS) * gamma + beta

    hidden = [h]
    for l in range(L):
        qkv = mm(h, wqkv[l]) + bqkv[l]
        q, k, v = qkv[..., :H], qkv[..., H:2 * H], qkv[..., 2 * H:]
        qh = q.reshape(B, S, nh, dh).transpose(0, 2, 1, 3)
        kh = k.reshape(B, S, nh, dh).transpose(0, 2, 1, 3)
        vh = v.reshape(B, S, nh, dh).transpose(0, 2, 1, 3)
        s = jnp.einsum('bnqd,bnkd->bnqk', qh.astype(bf), kh.astype(bf),
                       preferred_element_type=jnp.float32) * scale
        s = s - s.max(-1, keepdims=True)
        p = jnp.exp(s)
        p = p / p.sum(-1, keepdims=True)
        ctx = jnp.einsum('bnqk,bnkd->bnqd', p.astype(bf), vh.astype(bf),
                         preferred_element_type=jnp.float32)
        ctx = ctx.transpose(0, 2, 1, 3).reshape(B, S, H)
        attn = mm(ctx, wao[l]) + bao[l]
        h = ln(h + attn, ln1g[l], ln1b[l])
        inter = jax.nn.gelu(mm(h, wi[l]) + bi[l], approximate=True)
        ffn = mm(inter, wo[l]) + bo[l]
        h = ln(h + ffn, ln2g[l], ln2b[l])
        hidden.append(h)
    return hidden[-2] + hidden[-1]


# --------------------------------------------------------------------------
if __name__ == "__main__":
    # tiny BERT-like config: batch=4, seq=16, hidden=32, 2 heads, 4 layers
    B, S, H, NH, L, V = 4, 16, 32, 2, 4, 64
    FF = 4 * H

    key = jax.random.PRNGKey(0)
    ks = jax.random.split(key, 18)
    f32 = jnp.float32
    std = 0.05

    ids = jax.random.randint(ks[0], (B, S), 0, V)

    word_emb = std * jax.random.normal(ks[1], (V, H), f32)
    pos_emb = std * jax.random.normal(ks[2], (S, H), f32)
    type_emb = std * jax.random.normal(ks[3], (2, H), f32)
    emb_g = 1.0 + 0.1 * jax.random.normal(ks[4], (H,), f32)
    emb_b = 0.1 * jax.random.normal(ks[5], (H,), f32)
    emb_params = (word_emb, pos_emb, type_emb, emb_g, emb_b)

    wqkv = std * jax.random.normal(ks[6], (L, H, 3 * H), f32)
    bqkv = std * jax.random.normal(ks[7], (L, 1, 3 * H), f32)
    wao = std * jax.random.normal(ks[8], (L, H, H), f32)
    bao = std * jax.random.normal(ks[9], (L, 1, H), f32)
    ln1g = 1.0 + 0.1 * jax.random.normal(ks[10], (L, 1, H), f32)
    ln1b = 0.1 * jax.random.normal(ks[11], (L, 1, H), f32)
    wi = std * jax.random.normal(ks[12], (L, H, FF), f32)
    bi = std * jax.random.normal(ks[13], (L, 1, FF), f32)
    wo = std * jax.random.normal(ks[14], (L, FF, H), f32)
    bo = std * jax.random.normal(ks[15], (L, 1, H), f32)
    ln2g = 1.0 + 0.1 * jax.random.normal(ks[16], (L, 1, H), f32)
    ln2b = 0.1 * jax.random.normal(ks[17], (L, 1, H), f32)
    layer_params = (wqkv, bqkv, wao, bao, ln1g, ln1b, wi, bi, wo, bo, ln2g, ln2b)

    out = bert_mid_layer(ids, emb_params, layer_params, NH)
    out = jax.block_until_ready(out)

    ref = jax.block_until_ready(reference(ids, emb_params, layer_params, NH))
    assert out.shape == (B, S, H)
    max_err = float(jnp.max(jnp.abs(out - ref)))
    assert jnp.allclose(out, ref, rtol=1e-2, atol=1e-2), max_err

    print("KERNEL_OK")
</pallas_src>

<mosaic_0001>
module attributes {stable_mosaic.version = 11 : i64} {
  func.func @kernel(%arg0: i32, %arg1: i32, %arg2: memref<4x16x32xf32, #tpu.memory_space<vmem>>, %arg3: memref<1x32x96xbf16, #tpu.memory_space<vmem>>, %arg4: memref<1x1x96xf32, #tpu.memory_space<vmem>>, %arg5: memref<1x32x32xbf16, #tpu.memory_space<vmem>>, %arg6: memref<1x32x128xbf16, #tpu.memory_space<vmem>>, %arg7: memref<1x1x128xf32, #tpu.memory_space<vmem>>, %arg8: memref<1x128x32xbf16, #tpu.memory_space<vmem>>, %arg9: memref<1x8x32xf32, #tpu.memory_space<vmem>>, %arg10: memref<4x16x32xf32, #tpu.memory_space<vmem>>, %arg11: memref<64x32xf32, #tpu.memory_space<vmem>>) attributes {dimension_semantics = [#tpu.dimension_semantics<parallel>, #tpu.dimension_semantics<arbitrary>], iteration_bounds = array<i64: 1, 4>, scalar_prefetch = 0 : i64, scratch_operands = 1 : i64, tpu.core_type = #tpu.core_type<tc>, window_params = [{transform_indices = @transform_0, window_bounds = array<i64: 4, 16, 32>}, {transform_indices = @transform_1, window_bounds = array<i64: 1, 32, 96>}, {transform_indices = @transform_2, window_bounds = array<i64: 1, 1, 96>}, {transform_indices = @transform_3, window_bounds = array<i64: 1, 32, 32>}, {transform_indices = @transform_4, window_bounds = array<i64: 1, 32, 128>}, {transform_indices = @transform_5, window_bounds = array<i64: 1, 1, 128>}, {transform_indices = @transform_6, window_bounds = array<i64: 1, 128, 32>}, {transform_indices = @transform_7, window_bounds = array<i64: 1, 8, 32>}, {transform_indices = @transform_8, window_bounds = array<i64: 4, 16, 32>}]} {
    %c0_i32 = arith.constant 0 : i32
    %0 = arith.cmpi eq, %arg1, %c0_i32 : i32
    %1 = arith.extui %0 : i1 to i32
    %c0_i32_0 = arith.constant 0 : i32
    %2 = arith.cmpi ne, %1, %c0_i32_0 : i32
    scf.if %2 {
      %c0_58 = arith.constant 0 : index
      %c0_59 = arith.constant 0 : index
      %c0_60 = arith.constant 0 : index
      %192 = vector.load %arg2[%c0_58, %c0_59, %c0_60] : memref<4x16x32xf32, #tpu.memory_space<vmem>>, vector<1x16x32xf32>
      %193 = vector.shape_cast %192 : vector<1x16x32xf32> to vector<16x32xf32>
      %c0_61 = arith.constant 0 : index
      %c0_62 = arith.constant 0 : index
      %194 = vector.load %arg11[%c0_61, %c0_62] : memref<64x32xf32, #tpu.memory_space<vmem>>, vector<16x32xf32>
      tpu.vector_store %arg11[%c0_61, %c0_62], %193 {strides = array<i32>} : memref<64x32xf32, #tpu.memory_space<vmem>>, vector<16x32xf32>,
      %c1_63 = arith.constant 1 : index
      %c0_64 = arith.constant 0 : index
      %c0_65 = arith.constant 0 : index
      %195 = vector.load %arg2[%c1_63, %c0_64, %c0_65] : memref<4x16x32xf32, #tpu.memory_space<vmem>>, vector<1x16x32xf32>
      %196 = vector.shape_cast %195 : vector<1x16x32xf32> to vector<16x32xf32>
      %c16 = arith.constant 16 : index
      %c0_66 = arith.constant 0 : index
      %197 = vector.load %arg11[%c16, %c0_66] : memref<64x32xf32, #tpu.memory_space<vmem>>, vector<16x32xf32>
      tpu.vector_store %arg11[%c16, %c0_66], %196 {strides = array<i32>} : memref<64x32xf32, #tpu.memory_space<vmem>>, vector<16x32xf32>,
      %c2_67 = arith.constant 2 : index
      %c0_68 = arith.constant 0 : index
      %c0_69 = arith.constant 0 : index
      %198 = vector.load %arg2[%c2_67, %c0_68, %c0_69] : memref<4x16x32xf32, #tpu.memory_space<vmem>>, vector<1x16x32xf32>
      %199 = vector.shape_cast %198 : vector<1x16x32xf32> to vector<16x32xf32>
      %c32 = arith.constant 32 : index
      %c0_70 = arith.constant 0 : index
      %200 = vector.load %arg11[%c32, %c0_70] : memref<64x32xf32, #tpu.memory_space<vmem>>, vector<16x32xf32>
      tpu.vector_store %arg11[%c32, %c0_70], %199 {strides = array<i32>} : memref<64x32xf32, #tpu.memory_space<vmem>>, vector<16x32xf32>,
      %c3_71 = arith.constant 3 : index
      %c0_72 = arith.constant 0 : index
      %c0_73 = arith.constant 0 : index
      %201 = vector.load %arg2[%c3_71, %c0_72, %c0_73] : memref<4x16x32xf32, #tpu.memory_space<vmem>>, vector<1x16x32xf32>
      %202 = vector.shape_cast %201 : vector<1x16x32xf32> to vector<16x32xf32>
      %c48 = arith.constant 48 : index
      %c0_74 = arith.constant 0 : index
      %203 = vector.load %arg11[%c48, %c0_74] : memref<64x32xf32, #tpu.memory_space<vmem>>, vector<16x32xf32>
      tpu.vector_store %arg11[%c48, %c0_74], %202 {strides = array<i32>} : memref<64x32xf32, #tpu.memory_space<vmem>>, vector<16x32xf32>,
    } else {
    }
    %c0 = arith.constant 0 : index
    %c0_1 = arith.constant 0 : index
    %3 = vector.load %arg11[%c0, %c0_1] : memref<64x32xf32, #tpu.memory_space<vmem>>, vector<64x32xf32>
    %c0_2 = arith.constant 0 : index
    %c0_3 = arith.constant 0 : index
    %c0_4 = arith.constant 0 : index
    %4 = vector.load %arg9[%c0_2, %c0_3, %c0_4] : memref<1x8x32xf32, #tpu.memory_space<vmem>>, vector<1x1x32xf32>
    %5 = vector.shape_cast %4 : vector<1x1x32xf32> to vector<1x32xf32>
    %c0_5 = arith.constant 0 : index
    %c1 = arith.constant 1 : index
    %c0_6 = arith.constant 0 : index
    %6 = vector.load %arg9[%c0_5, %c1, %c0_6] : memref<1x8x32xf32, #tpu.memory_space<vmem>>, vector<1x1x32xf32>
    %7 = vector.shape_cast %6 : vector<1x1x32xf32> to vector<1x32xf32>
    %c0_7 = arith.constant 0 : index
    %c2 = arith.constant 2 : index
    %c0_8 = arith.constant 0 : index
    %8 = vector.load %arg9[%c0_7, %c2, %c0_8] : memref<1x8x32xf32, #tpu.memory_space<vmem>>, vector<1x1x32xf32>
    %9 = vector.shape_cast %8 : vector<1x1x32xf32> to vector<1x32xf32>
    %c0_9 = arith.constant 0 : index
    %c3 = arith.constant 3 : index
    %c0_10 = arith.constant 0 : index
    %10 = vector.load %arg9[%c0_9, %c3, %c0_10] : memref<1x8x32xf32, #tpu.memory_space<vmem>>, vector<1x1x32xf32>
    %11 = vector.shape_cast %10 : vector<1x1x32xf32> to vector<1x32xf32>
    %c0_11 = arith.constant 0 : index
    %c4 = arith.constant 4 : index
    %c0_12 = arith.constant 0 : index
    %12 = vector.load %arg9[%c0_11, %c4, %c0_12] : memref<1x8x32xf32, #tpu.memory_space<vmem>>, vector<1x1x32xf32>
    %13 = vector.shape_cast %12 : vector<1x1x32xf32> to vector<1x32xf32>
    %c0_13 = arith.constant 0 : index
    %c5 = arith.constant 5 : index
    %c0_14 = arith.constant 0 : index
    %14 = vector.load %arg9[%c0_13, %c5, %c0_14] : memref<1x8x32xf32, #tpu.memory_space<vmem>>, vector<1x1x32xf32>
    %15 = vector.shape_cast %14 : vector<1x1x32xf32> to vector<1x32xf32>
    %c0_15 = arith.constant 0 : index
    %c0_16 = arith.constant 0 : index
    %c0_17 = arith.constant 0 : index
    %16 = vector.load %arg3[%c0_15, %c0_16, %c0_17] : memref<1x32x96xbf16, #tpu.memory_space<vmem>>, vector<1x32x96xbf16>
    %17 = vector.shape_cast %16 : vector<1x32x96xbf16> to vector<32x96xbf16>
    %18 = arith.truncf %3 : vector<64x32xf32> to vector<64x32xbf16>
    %cst = arith.constant dense<0.000000e+00> : vector<64x96xf32>
    %19 = tpu.matmul %18, %17, %cst {dimension_numbers = #tpu.dot_dimension_numbers<[1], [0], [0], [1], [0, 0, 1, 1], [], []>} : vector<64x32xbf16>, vector<32x96xbf16>, vector<64x96xf32> -> vector<64x96xf32>
    %c0_18 = arith.constant 0 : index
    %c0_19 = arith.constant 0 : index
    %c0_20 = arith.constant 0 : index
    %20 = vector.load %arg4[%c0_18, %c0_19, %c0_20] : memref<1x1x96xf32, #tpu.memory_space<vmem>>, vector<1x1x96xf32>
    %21 = vector.shape_cast %20 : vector<1x1x96xf32> to vector<1x96xf32>
    %22 = vector.broadcast %21 : vector<1x96xf32> to vector<64x96xf32>
    %23 = arith.addf %19, %22 : vector<64x96xf32>
    %24 = arith.truncf %23 : vector<64x96xf32> to vector<64x96xbf16>
    %25 = vector.extract_strided_slice %24 {offsets = [0, 0], sizes = [16, 16], strides = [1, 1]} : vector<64x96xbf16> to vector<16x16xbf16>
    %26 = vector.extract_strided_slice %24 {offsets = [0, 16], sizes = [16, 16], strides = [1, 1]} : vector<64x96xbf16> to vector<16x16xbf16>
    %27 = vector.extract_strided_slice %24 {offsets = [16, 0], sizes = [16, 16], strides = [1, 1]} : vector<64x96xbf16> to vector<16x16xbf16>
    %28 = vector.extract_strided_slice %24 {offsets = [16, 16], sizes = [16, 16], strides = [1, 1]} : vector<64x96xbf16> to vector<16x16xbf16>
    %29 = vector.extract_strided_slice %24 {offsets = [32, 0], sizes = [16, 16], strides = [1, 1]} : vector<64x96xbf16> to vector<16x16xbf16>
    %30 = vector.extract_strided_slice %24 {offsets = [32, 16], sizes = [16, 16], strides = [1, 1]} : vector<64x96xbf16> to vector<16x16xbf16>
    %31 = vector.extract_strided_slice %24 {offsets = [48, 0], sizes = [16, 16], strides = [1, 1]} : vector<64x96xbf16> to vector<16x16xbf16>
    %32 = vector.extract_strided_slice %24 {offsets = [48, 16], sizes = [16, 16], strides = [1, 1]} : vector<64x96xbf16> to vector<16x16xbf16>
    %33 = vector.shape_cast %25 : vector<16x16xbf16> to vector<1x16x16xbf16>
    %34 = vector.shape_cast %26 : vector<16x16xbf16> to vector<1x16x16xbf16>
    %35 = vector.shape_cast %27 : vector<16x16xbf16> to vector<1x16x16xbf16>
    %36 = vector.shape_cast %28 : vector<16x16xbf16> to vector<1x16x16xbf16>
    %37 = vector.shape_cast %29 : vector<16x16xbf16> to vector<1x16x16xbf16>
    %38 = vector.shape_cast %30 : vector<16x16xbf16> to vector<1x16x16xbf16>
    %39 = vector.shape_cast %31 : vector<16x16xbf16> to vector<1x16x16xbf16>
    %40 = vector.shape_cast %32 : vector<16x16xbf16> to vector<1x16x16xbf16>
    %41 = tpu.concatenate %33, %34, %35, %36, %37, %38, %39, %40 in 0 : vector<1x16x16xbf16>, vector<1x16x16xbf16>, vector<1x16x16xbf16>, vector<1x16x16xbf16>, vector<1x16x16xbf16>, vector<1x16x16xbf16>, vector<1x16x16xbf16>, vector<1x16x16xbf16> -> vector<8x16x16xbf16>
    %42 = vector.extract_strided_slice %24 {offsets = [0, 32], sizes = [16, 16], strides = [1, 1]} : vector<64x96xbf16> to vector<16x16xbf16>
    %43 = vector.extract_strided_slice %24 {offsets = [0, 48], sizes = [16, 16], strides = [1, 1]} : vector<64x96xbf16> to vector<16x16xbf16>
    %44 = vector.extract_strided_slice %24 {offsets = [16, 32], sizes = [16, 16], strides = [1, 1]} : vector<64x96xbf16> to vector<16x16xbf16>
    %45 = vector.extract_strided_slice %24 {offsets = [16, 48], sizes = [16, 16], strides = [1, 1]} : vector<64x96xbf16> to vector<16x16xbf16>
    %46 = vector.extract_strided_slice %24 {offsets = [32, 32], sizes = [16, 16], strides = [1, 1]} : vector<64x96xbf16> to vector<16x16xbf16>
    %47 = vector.extract_strided_slice %24 {offsets = [32, 48], sizes = [16, 16], strides = [1, 1]} : vector<64x96xbf16> to vector<16x16xbf16>
    %48 = vector.extract_strided_slice %24 {offsets = [48, 32], sizes = [16, 16], strides = [1, 1]} : vector<64x96xbf16> to vector<16x16xbf16>
    %49 = vector.extract_strided_slice %24 {offsets = [48, 48], sizes = [16, 16], strides = [1, 1]} : vector<64x96xbf16> to vector<16x16xbf16>
    %50 = vector.shape_cast %42 : vector<16x16xbf16> to vector<1x16x16xbf16>
    %51 = vector.shape_cast %43 : vector<16x16xbf16> to vector<1x16x16xbf16>
    %52 = vector.shape_cast %44 : vector<16x16xbf16> to vector<1x16x16xbf16>
    %53 = vector.shape_cast %45 : vector<16x16xbf16> to vector<1x16x16xbf16>
    %54 = vector.shape_cast %46 : vector<16x16xbf16> to vector<1x16x16xbf16>
    %55 = vector.shape_cast %47 : vector<16x16xbf16> to vector<1x16x16xbf16>
    %56 = vector.shape_cast %48 : vector<16x16xbf16> to vector<1x16x16xbf16>
    %57 = vector.shape_cast %49 : vector<16x16xbf16> to vector<1x16x16xbf16>
    %58 = tpu.concatenate %50, %51, %52, %53, %54, %55, %56, %57 in 0 : vector<1x16x16xbf16>, vector<1x16x16xbf16>, vector<1x16x16xbf16>, vector<1x16x16xbf16>, vector<1x16x16xbf16>, vector<1x16x16xbf16>, vector<1x16x16xbf16>, vector<1x16x16xbf16> -> vector<8x16x16xbf16>
    %59 = vector.extract_strided_slice %24 {offsets = [0, 64], sizes = [16, 16], strides = [1, 1]} : vector<64x96xbf16> to vector<16x16xbf16>
    %60 = vector.extract_strided_slice %24 {offsets = [0, 80], sizes = [16, 16], strides = [1, 1]} : vector<64x96xbf16> to vector<16x16xbf16>
    %61 = vector.extract_strided_slice %24 {offsets = [16, 64], sizes = [16, 16], strides = [1, 1]} : vector<64x96xbf16> to vector<16x16xbf16>
    %62 = vector.extract_strided_slice %24 {offsets = [16, 80], sizes = [16, 16], strides = [1, 1]} : vector<64x96xbf16> to vector<16x16xbf16>
    %63 = vector.extract_strided_slice %24 {offsets = [32, 64], sizes = [16, 16], strides = [1, 1]} : vector<64x96xbf16> to vector<16x16xbf16>
    %64 = vector.extract_strided_slice %24 {offsets = [32, 80], sizes = [16, 16], strides = [1, 1]} : vector<64x96xbf16> to vector<16x16xbf16>
    %65 = vector.extract_strided_slice %24 {offsets = [48, 64], sizes = [16, 16], strides = [1, 1]} : vector<64x96xbf16> to vector<16x16xbf16>
    %66 = vector.extract_strided_slice %24 {offsets = [48, 80], sizes = [16, 16], strides = [1, 1]} : vector<64x96xbf16> to vector<16x16xbf16>
    %67 = vector.shape_cast %59 : vector<16x16xbf16> to vector<1x16x16xbf16>
    %68 = vector.shape_cast %60 : vector<16x16xbf16> to vector<1x16x16xbf16>
    %69 = vector.shape_cast %61 : vector<16x16xbf16> to vector<1x16x16xbf16>
    %70 = vector.shape_cast %62 : vector<16x16xbf16> to vector<1x16x16xbf16>
    %71 = vector.shape_cast %63 : vector<16x16xbf16> to vector<1x16x16xbf16>
    %72 = vector.shape_cast %64 : vector<16x16xbf16> to vector<1x16x16xbf16>
    %73 = vector.shape_cast %65 : vector<16x16xbf16> to vector<1x16x16xbf16>
    %74 = vector.shape_cast %66 : vector<16x16xbf16> to vector<1x16x16xbf16>
    %75 = tpu.concatenate %67, %68, %69, %70, %71, %72, %73, %74 in 0 : vector<1x16x16xbf16>, vector<1x16x16xbf16>, vector<1x16x16xbf16>, vector<1x16x16xbf16>, vector<1x16x16xbf16>, vector<1x16x16xbf16>, vector<1x16x16xbf16>, vector<1x16x16xbf16> -> vector<8x16x16xbf16>
    "tpu.trace_start"() <{level = 10 : i32, message = "hqd,hkd->hqk"}> : () -> ()
    %cst_21 = arith.constant dense<0.000000e+00> : vector<8x16x16xf32>
    %76 = tpu.matmul %41, %58, %cst_21 {dimension_numbers = #tpu.dot_dimension_numbers<[2], [2], [1], [1], [0, 0, 0, 1, 1, 1], [0], [0]>} : vector<8x16x16xbf16>, vector<8x16x16xbf16>, vector<8x16x16xf32> -> vector<8x16x16xf32>
    "tpu.trace_stop"() : () -> ()
    %cst_22 = arith.constant dense<0xFF800000> : vector<8x16xf32>
    %77 = vector.multi_reduction <maximumf>, %76, %cst_22 [2] : vector<8x16x16xf32> to vector<8x16xf32>
    %78 = vector.shape_cast %77 : vector<8x16xf32> to vector<8x16x1xf32>
    %79 = vector.broadcast %78 : vector<8x16x1xf32> to vector<8x16x16xf32>
    %80 = arith.subf %76, %79 : vector<8x16x16xf32>
    %81 = math.exp %80 : vector<8x16x16xf32>
    %cst_23 = arith.constant dense<0.000000e+00> : vector<8x16xf32>
    %82 = vector.multi_reduction <add>, %81, %cst_23 [2] : vector<8x16x16xf32> to vector<8x16xf32>
    %83 = vector.shape_cast %82 : vector<8x16xf32> to vector<8x16x1xf32>
    %84 = tpu.reciprocal %83 {approx = true} : vector<8x16x1xf32> -> vector<8x16x1xf32>
    %85 = vector.broadcast %84 : vector<8x16x1xf32> to vector<8x16x16xf32>
    %86 = arith.mulf %81, %85 : vector<8x16x16xf32>
    %87 = arith.truncf %86 : vector<8x16x16xf32> to vector<8x16x16xbf16>
    "tpu.trace_start"() <{level = 10 : i32, message = "hqk,hkd->hqd"}> : () -> ()
    %cst_24 = arith.constant dense<0.000000e+00> : vector<8x16x16xf32>
    %88 = tpu.matmul %87, %75, %cst_24 {dimension_numbers = #tpu.dot_dimension_numbers<[2], [1], [1], [2], [0, 0, 0, 1, 1, 2], [0], [0]>} : vector<8x16x16xbf16>, vector<8x16x16xbf16>, vector<8x16x16xf32> -> vector<8x16x16xf32>
    "tpu.trace_stop"() : () -> ()
    %89 = vector.extract_strided_slice %88 {offsets = [0, 0, 0], sizes = [1, 16, 16], strides = [1, 1, 1]} : vector<8x16x16xf32> to vector<1x16x16xf32>
    %90 = vector.shape_cast %89 : vector<1x16x16xf32> to vector<16x16xf32>
    %91 = vector.extract_strided_slice %88 {offsets = [1, 0, 0], sizes = [1, 16, 16], strides = [1, 1, 1]} : vector<8x16x16xf32> to vector<1x16x16xf32>
    %92 = vector.shape_cast %91 : vector<1x16x16xf32> to vector<16x16xf32>
    %93 = tpu.concatenate %90, %92 in 1 : vector<16x16xf32>, vector<16x16xf32> -> vector<16x32xf32>
    %94 = vector.extract_strided_slice %88 {offsets = [2, 0, 0], sizes = [1, 16, 16], strides = [1, 1, 1]} : vector<8x16x16xf32> to vector<1x16x16xf32>
    %95 = vector.shape_cast %94 : vector<1x16x16xf32> to vector<16x16xf32>
    %96 = vector.extract_strided_slice %88 {offsets = [3, 0, 0], sizes = [1, 16, 16], strides = [1, 1, 1]} : vector<8x16x16xf32> to vector<1x16x16xf32>
    %97 = vector.shape_cast %96 : vector<1x16x16xf32> to vector<16x16xf32>
    %98 = tpu.concatenate %95, %97 in 1 : vector<16x16xf32>, vector<16x16xf32> -> vector<16x32xf32>
    %99 = vector.extract_strided_slice %88 {offsets = [4, 0, 0], sizes = [1, 16, 16], strides = [1, 1, 1]} : vector<8x16x16xf32> to vector<1x16x16xf32>
    %100 = vector.shape_cast %99 : vector<1x16x16xf32> to vector<16x16xf32>
    %101 = vector.extract_strided_slice %88 {offsets = [5, 0, 0], sizes = [1, 16, 16], strides = [1, 1, 1]} : vector<8x16x16xf32> to vector<1x16x16xf32>
    %102 = vector.shape_cast %101 : vector<1x16x16xf32> to vector<16x16xf32>
    %103 = tpu.concatenate %100, %102 in 1 : vector<16x16xf32>, vector<16x16xf32> -> vector<16x32xf32>
    %104 = vector.extract_strided_slice %88 {offsets = [6, 0, 0], sizes = [1, 16, 16], strides = [1, 1, 1]} : vector<8x16x16xf32> to vector<1x16x16xf32>
    %105 = vector.shape_cast %104 : vector<1x16x16xf32> to vector<16x16xf32>
    %106 = vector.extract_strided_slice %88 {offsets = [7, 0, 0], sizes = [1, 16, 16], strides = [1, 1, 1]} : vector<8x16x16xf32> to vector<1x16x16xf32>
    %107 = vector.shape_cast %106 : vector<1x16x16xf32> to vector<16x16xf32>
    %108 = tpu.concatenate %105, %107 in 1 : vector<16x16xf32>, vector<16x16xf32> -> vector<16x32xf32>
    %109 = tpu.concatenate %93, %98, %103, %108 in 0 : vector<16x32xf32>, vector<16x32xf32>, vector<16x32xf32>, vector<16x32xf32> -> vector<64x32xf32>
    %c0_25 = arith.constant 0 : index
    %c0_26 = arith.constant 0 : index
    %c0_27 = arith.constant 0 : index
    %110 = vector.load %arg5[%c0_25, %c0_26, %c0_27] : memref<1x32x32xbf16, #tpu.memory_space<vmem>>, vector<1x32x32xbf16>
    %111 = vector.shape_cast %110 : vector<1x32x32xbf16> to vector<32x32xbf16>
    %112 = arith.truncf %109 : vector<64x32xf32> to vector<64x32xbf16>
    %cst_28 = arith.constant dense<0.000000e+00> : vector<64x32xf32>
    %113 = tpu.matmul %112, %111, %cst_28 {dimension_numbers = #tpu.dot_dimension_numbers<[1], [0], [0], [1], [0, 0, 1, 1], [], []>} : vector<64x32xbf16>, vector<32x32xbf16>, vector<64x32xf32> -> vector<64x32xf32>
    %114 = vector.broadcast %5 : vector<1x32xf32> to vector<64x32xf32>
    %115 = arith.addf %113, %114 : vector<64x32xf32>
    %116 = arith.addf %3, %115 : vector<64x32xf32>
    %cst_29 = arith.constant dense<0.000000e+00> : vector<64xf32>
    %117 = vector.multi_reduction <add>, %116, %cst_29 [1] : vector<64x32xf32> to vector<64xf32>
    %118 = vector.shape_cast %117 : vector<64xf32> to vector<64x1xf32>
    %cst_30 = arith.constant 3.200000e+01 : f32
    %119 = vector.broadcast %cst_30 : f32 to vector<64x1xf32>
    %120 = arith.divf %118, %119 : vector<64x1xf32>
    %121 = vector.broadcast %120 : vector<64x1xf32> to vector<64x32xf32>
    %122 = arith.subf %116, %121 : vector<64x32xf32>
    %123 = arith.mulf %122, %122 : vector<64x32xf32>
    %cst_31 = arith.constant dense<0.000000e+00> : vector<64xf32>
    %124 = vector.multi_reduction <add>, %123, %cst_31 [1] : vector<64x32xf32> to vector<64xf32>
    %125 = vector.shape_cast %124 : vector<64xf32> to vector<64x1xf32>
    %cst_32 = arith.constant 3.200000e+01 : f32
    %126 = vector.broadcast %cst_32 : f32 to vector<64x1xf32>
    %127 = arith.divf %125, %126 : vector<64x1xf32>
    %cst_33 = arith.constant 9.99999996E-13 : f32
    %128 = vector.broadcast %cst_33 : f32 to vector<64x1xf32>
    %129 = arith.addf %127, %128 : vector<64x1xf32>
    %130 = math.rsqrt %129 : vector<64x1xf32>
    %131 = vector.broadcast %130 : vector<64x1xf32> to vector<64x32xf32>
    %132 = arith.mulf %122, %131 : vector<64x32xf32>
    %133 = vector.broadcast %9 : vector<1x32xf32> to vector<64x32xf32>
    %134 = arith.mulf %132, %133 : vector<64x32xf32>
    %135 = vector.broadcast %11 : vector<1x32xf32> to vector<64x32xf32>
    %136 = arith.addf %134, %135 : vector<64x32xf32>
    %c0_34 = arith.constant 0 : index
    %c0_35 = arith.constant 0 : index
    %c0_36 = arith.constant 0 : index
    %137 = vector.load %arg6[%c0_34, %c0_35, %c0_36] : memref<1x32x128xbf16, #tpu.memory_space<vmem>>, vector<1x32x128xbf16>
    %138 = vector.shape_cast %137 : vector<1x32x128xbf16> to vector<32x128xbf16>
    %139 = arith.truncf %136 : vector<64x32xf32> to vector<64x32xbf16>
    %cst_37 = arith.constant dense<0.000000e+00> : vector<64x128xf32>
    %140 = tpu.matmul %139, %138, %cst_37 {dimension_numbers = #tpu.dot_dimension_numbers<[1], [0], [0], [1], [0, 0, 1, 1], [], []>} : vector<64x32xbf16>, vector<32x128xbf16>, vector<64x128xf32> -> vector<64x128xf32>
    %c0_38 = arith.constant 0 : index
    %c0_39 = arith.constant 0 : index
    %c0_40 = arith.constant 0 : index
    %141 = vector.load %arg7[%c0_38, %c0_39, %c0_40] : memref<1x1x128xf32, #tpu.memory_space<vmem>>, vector<1x1x128xf32>
    %142 = vector.shape_cast %141 : vector<1x1x128xf32> to vector<1x128xf32>
    %143 = vector.broadcast %142 : vector<1x128xf32> to vector<64x128xf32>
    %144 = arith.addf %140, %143 : vector<64x128xf32>
    %145 = arith.mulf %144, %144 : vector<64x128xf32>
    %146 = arith.mulf %144, %145 : vector<64x128xf32>
    %cst_41 = arith.constant 4.471500e-02 : f32
    %147 = vector.broadcast %cst_41 : f32 to vector<64x128xf32>
    %148 = arith.mulf %147, %146 : vector<64x128xf32>
    %149 = arith.addf %144, %148 : vector<64x128xf32>
    %cst_42 = arith.constant 0.797884583 : f32
    %150 = vector.broadcast %cst_42 : f32 to vector<64x128xf32>
    %151 = arith.mulf %150, %149 : vector<64x128xf32>
    %152 = math.tanh %151 : vector<64x128xf32>
    %cst_43 = arith.constant 1.000000e+00 : f32
    %153 = vector.broadcast %cst_43 : f32 to vector<64x128xf32>
    %154 = arith.addf %153, %152 : vector<64x128xf32>
    %cst_44 = arith.constant 5.000000e-01 : f32
    %155 = vector.broadcast %cst_44 : f32 to vector<64x128xf32>
    %156 = arith.mulf %155, %154 : vector<64x128xf32>
    %157 = arith.mulf %144, %156 : vector<64x128xf32>
    %c0_45 = arith.constant 0 : index
    %c0_46 = arith.constant 0 : index
    %c0_47 = arith.constant 0 : index
    %158 = vector.load %arg8[%c0_45, %c0_46, %c0_47] : memref<1x128x32xbf16, #tpu.memory_space<vmem>>, vector<1x128x32xbf16>
    %159 = vector.shape_cast %158 : vector<1x128x32xbf16> to vector<128x32xbf16>
    %160 = arith.truncf %157 : vector<64x128xf32> to vector<64x128xbf16>
    %cst_48 = arith.constant dense<0.000000e+00> : vector<64x32xf32>
    %161 = tpu.matmul %160, %159, %cst_48 {dimension_numbers = #tpu.dot_dimension_numbers<[1], [0], [0], [1], [0, 0, 1, 1], [], []>} : vector<64x128xbf16>, vector<128x32xbf16>, vector<64x32xf32> -> vector<64x32xf32>
    %162 = vector.broadcast %7 : vector<1x32xf32> to vector<64x32xf32>
    %163 = arith.addf %161, %162 : vector<64x32xf32>
    %164 = arith.addf %136, %163 : vector<64x32xf32>
    %cst_49 = arith.constant dense<0.000000e+00> : vector<64xf32>
    %165 = vector.multi_reduction <add>, %164, %cst_49 [1] : vector<64x32xf32> to vector<64xf32>
    %166 = vector.shape_cast %165 : vector<64xf32> to vector<64x1xf32>
    %cst_50 = arith.constant 3.200000e+01 : f32
    %167 = vector.broadcast %cst_50 : f32 to vector<64x1xf32>
    %168 = arith.divf %166, %167 : vector<64x1xf32>
    %169 = vector.broadcast %168 : vector<64x1xf32> to vector<64x32xf32>
    %170 = arith.subf %164, %169 : vector<64x32xf32>
    %171 = arith.mulf %170, %170 : vector<64x32xf32>
    %cst_51 = arith.constant dense<0.000000e+00> : vector<64xf32>
    %172 = vector.multi_reduction <add>, %171, %cst_51 [1] : vector<64x32xf32> to vector<64xf32>
    %173 = vector.shape_cast %172 : vector<64xf32> to vector<64x1xf32>
    %cst_52 = arith.constant 3.200000e+01 : f32
    %174 = vector.broadcast %cst_52 : f32 to vector<64x1xf32>
    %175 = arith.divf %173, %174 : vector<64x1xf32>
    %cst_53 = arith.constant 9.99999996E-13 : f32
    %176 = vector.broadcast %cst_53 : f32 to vector<64x1xf32>
    %177 = arith.addf %175, %176 : vector<64x1xf32>
    %178 = math.rsqrt %177 : vector<64x1xf32>
    %179 = vector.broadcast %178 : vector<64x1xf32> to vector<64x32xf32>
    %180 = arith.mulf %170, %179 : vector<64x32xf32>
    %181 = vector.broadcast %13 : vector<1x32xf32> to vector<64x32xf32>
    %182 = arith.mulf %180, %181 : vector<64x32xf32>
    %183 = vector.broadcast %15 : vector<1x32xf32> to vector<64x32xf32>
    %184 = arith.addf %182, %183 : vector<64x32xf32>
    %c0_54 = arith.constant 0 : index
    %c0_55 = arith.constant 0 : index
    %185 = vector.load %arg11[%c0_54, %c0_55] : memref<64x32xf32, #tpu.memory_space<vmem>>, vector<64x32xf32>
    tpu.vector_store %arg11[%c0_54, %c0_55], %184 {strides = array<i32>} : memref<64x32xf32, #tpu.memory_space<vmem>>, vector<64x32xf32>,
    %c2_i32 = arith.constant 2 : i32
    %186 = arith.cmpi eq, %arg1, %c2_i32 : i32
    %187 = arith.extui %186 : i1 to i32
    %c0_i32_56 = arith.constant 0 : i32
    %188 = arith.cmpi ne, %187, %c0_i32_56 : i32
    scf.if %188 {
      %192 = vector.extract_strided_slice %184 {offsets = [0, 0], sizes = [16, 32], strides = [1, 1]} : vector<64x32xf32> to vector<16x32xf32>
      %c0_58 = arith.constant 0 : index
      %c0_59 = arith.constant 0 : index
      %c0_60 = arith.constant 0 : index
      %193 = vector.load %arg10[%c0_58, %c0_59, %c0_60] : memref<4x16x32xf32, #tpu.memory_space<vmem>>, vector<1x16x32xf32>
      %194 = vector.shape_cast %193 : vector<1x16x32xf32> to vector<16x32xf32>
      %195 = vector.shape_cast %192 : vector<16x32xf32> to vector<1x16x32xf32>
      tpu.vector_store %arg10[%c0_58, %c0_59, %c0_60], %195 {strides = array<i32>} : memref<4x16x32xf32, #tpu.memory_space<vmem>>, vector<1x16x32xf32>,
      %196 = vector.extract_strided_slice %184 {offsets = [16, 0], sizes = [16, 32], strides = [1, 1]} : vector<64x32xf32> to vector<16x32xf32>
      %c1_61 = arith.constant 1 : index
      %c0_62 = arith.constant 0 : index
      %c0_63 = arith.constant 0 : index
      %197 = vector.load %arg10[%c1_61, %c0_62, %c0_63] : memref<4x16x32xf32, #tpu.memory_space<vmem>>, vector<1x16x32xf32>
      %198 = vector.shape_cast %197 : vector<1x16x32xf32> to vector<16x32xf32>
      %199 = vector.shape_cast %196 : vector<16x32xf32> to vector<1x16x32xf32>
      tpu.vector_store %arg10[%c1_61, %c0_62, %c0_63], %199 {strides = array<i32>} : memref<4x16x32xf32, #tpu.memory_space<vmem>>, vector<1x16x32xf32>,
      %200 = vector.extract_strided_slice %184 {offsets = [32, 0], sizes = [16, 32], strides = [1, 1]} : vector<64x32xf32> to vector<16x32xf32>
      %c2_64 = arith.constant 2 : index
      %c0_65 = arith.constant 0 : index
      %c0_66 = arith.constant 0 : index
      %201 = vector.load %arg10[%c2_64, %c0_65, %c0_66] : memref<4x16x32xf32, #tpu.memory_space<vmem>>, vector<1x16x32xf32>
      %202 = vector.shape_cast %201 : vector<1x16x32xf32> to vector<16x32xf32>
      %203 = vector.shape_cast %200 : vector<16x32xf32> to vector<1x16x32xf32>
      tpu.vector_store %arg10[%c2_64, %c0_65, %c0_66], %203 {strides = array<i32>} : memref<4x16x32xf32, #tpu.memory_space<vmem>>, vector<1x16x32xf32>,
      %204 = vector.extract_strided_slice %184 {offsets = [48, 0], sizes = [16, 32], strides = [1, 1]} : vector<64x32xf32> to vector<16x32xf32>
      %c3_67 = arith.constant 3 : index
      %c0_68 = arith.constant 0 : index
      %c0_69 = arith.constant 0 : index
      %205 = vector.load %arg10[%c3_67, %c0_68, %c0_69] : memref<4x16x32xf32, #tpu.memory_space<vmem>>, vector<1x16x32xf32>
      %206 = vector.shape_cast %205 : vector<1x16x32xf32> to vector<16x32xf32>
      %207 = vector.shape_cast %204 : vector<16x32xf32> to vector<1x16x32xf32>
      tpu.vector_store %arg10[%c3_67, %c0_68, %c0_69], %207 {strides = array<i32>} : memref<4x16x32xf32, #tpu.memory_space<vmem>>, vector<1x16x32xf32>,
    } else {
    }
    %c3_i32 = arith.constant 3 : i32
    %189 = arith.cmpi eq, %arg1, %c3_i32 : i32
    %190 = arith.extui %189 : i1 to i32
    %c0_i32_57 = arith.constant 0 : i32
    %191 = arith.cmpi ne, %190, %c0_i32_57 : i32
    scf.if %191 {
      %c0_58 = arith.constant 0 : index
      %c0_59 = arith.constant 0 : index
      %c0_60 = arith.constant 0 : index
      %192 = vector.load %arg10[%c0_58, %c0_59, %c0_60] : memref<4x16x32xf32, #tpu.memory_space<vmem>>, vector<1x16x32xf32>
      %193 = vector.shape_cast %192 : vector<1x16x32xf32> to vector<16x32xf32>
      %194 = vector.extract_strided_slice %184 {offsets = [0, 0], sizes = [16, 32], strides = [1, 1]} : vector<64x32xf32> to vector<16x32xf32>
      %195 = arith.addf %193, %194 : vector<16x32xf32>
      %c0_61 = arith.constant 0 : index
      %c0_62 = arith.constant 0 : index
      %c0_63 = arith.constant 0 : index
      %196 = vector.load %arg10[%c0_61, %c0_62, %c0_63] : memref<4x16x32xf32, #tpu.memory_space<vmem>>, vector<1x16x32xf32>
      %197 = vector.shape_cast %196 : vector<1x16x32xf32> to vector<16x32xf32>
      %198 = vector.shape_cast %195 : vector<16x32xf32> to vector<1x16x32xf32>
      tpu.vector_store %arg10[%c0_61, %c0_62, %c0_63], %198 {strides = array<i32>} : memref<4x16x32xf32, #tpu.memory_space<vmem>>, vector<1x16x32xf32>,
      %c1_64 = arith.constant 1 : index
      %c0_65 = arith.constant 0 : index
      %c0_66 = arith.constant 0 : index
      %199 = vector.load %arg10[%c1_64, %c0_65, %c0_66] : memref<4x16x32xf32, #tpu.memory_space<vmem>>, vector<1x16x32xf32>
      %200 = vector.shape_cast %199 : vector<1x16x32xf32> to vector<16x32xf32>
      %201 = vector.extract_strided_slice %184 {offsets = [16, 0], sizes = [16, 32], strides = [1, 1]} : vector<64x32xf32> to vector<16x32xf32>
      %202 = arith.addf %200, %201 : vector<16x32xf32>
      %c1_67 = arith.constant 1 : index
      %c0_68 = arith.constant 0 : index
      %c0_69 = arith.constant 0 : index
      %203 = vector.load %arg10[%c1_67, %c0_68, %c0_69] : memref<4x16x32xf32, #tpu.memory_space<vmem>>, vector<1x16x32xf32>
      %204 = vector.shape_cast %203 : vector<1x16x32xf32> to vector<16x32xf32>
      %205 = vector.shape_cast %202 : vector<16x32xf32> to vector<1x16x32xf32>
      tpu.vector_store %arg10[%c1_67, %c0_68, %c0_69], %205 {strides = array<i32>} : memref<4x16x32xf32, #tpu.memory_space<vmem>>, vector<1x16x32xf32>,
      %c2_70 = arith.constant 2 : index
      %c0_71 = arith.constant 0 : index
      %c0_72 = arith.constant 0 : index
      %206 = vector.load %arg10[%c2_70, %c0_71, %c0_72] : memref<4x16x32xf32, #tpu.memory_space<vmem>>, vector<1x16x32xf32>
      %207 = vector.shape_cast %206 : vector<1x16x32xf32> to vector<16x32xf32>
      %208 = vector.extract_strided_slice %184 {offsets = [32, 0], sizes = [16, 32], strides = [1, 1]} : vector<64x32xf32> to vector<16x32xf32>
      %209 = arith.addf %207, %208 : vector<16x32xf32>
      %c2_73 = arith.constant 2 : index
      %c0_74 = arith.constant 0 : index
      %c0_75 = arith.constant 0 : index
      %210 = vector.load %arg10[%c2_73, %c0_74, %c0_75] : memref<4x16x32xf32, #tpu.memory_space<vmem>>, vector<1x16x32xf32>
      %211 = vector.shape_cast %210 : vector<1x16x32xf32> to vector<16x32xf32>
      %212 = vector.shape_cast %209 : vector<16x32xf32> to vector<1x16x32xf32>
      tpu.vector_store %arg10[%c2_73, %c0_74, %c0_75], %212 {strides = array<i32>} : memref<4x16x32xf32, #tpu.memory_space<vmem>>, vector<1x16x32xf32>,
      %c3_76 = arith.constant 3 : index
      %c0_77 = arith.constant 0 : index
      %c0_78 = arith.constant 0 : index
      %213 = vector.load %arg10[%c3_76, %c0_77, %c0_78] : memref<4x16x32xf32, #tpu.memory_space<vmem>>, vector<1x16x32xf32>
      %214 = vector.shape_cast %213 : vector<1x16x32xf32> to vector<16x32xf32>
      %215 = vector.extract_strided_slice %184 {offsets = [48, 0], sizes = [16, 32], strides = [1, 1]} : vector<64x32xf32> to vector<16x32xf32>
      %216 = arith.addf %214, %215 : vector<16x32xf32>
      %c3_79 = arith.constant 3 : index
      %c0_80 = arith.constant 0 : index
      %c0_81 = arith.constant 0 : index
      %217 = vector.load %arg10[%c3_79, %c0_80, %c0_81] : memref<4x16x32xf32, #tpu.memory_space<vmem>>, vector<1x16x32xf32>
      %218 = vector.shape_cast %217 : vector<1x16x32xf32> to vector<16x32xf32>
      %219 = vector.shape_cast %216 : vector<16x32xf32> to vector<1x16x32xf32>
      tpu.vector_store %arg10[%c3_79, %c0_80, %c0_81], %219 {strides = array<i32>} : memref<4x16x32xf32, #tpu.memory_space<vmem>>, vector<1x16x32xf32>,
    } else {
    }
    return
  }
  func.func @transform_0(%arg0: i32, %arg1: i32) -> (i32, i32, i32) {
    %c0_i32 = arith.constant 0 : i32
    %c0_i32_0 = arith.constant 0 : i32
    %c0_i32_1 = arith.constant 0 : i32
    return %arg0, %c0_i32, %c0_i32_0 : i32, i32, i32
  }
  func.func @transform_1(%arg0: i32, %arg1: i32) -> (i32, i32, i32) {
    %c0_i32 = arith.constant 0 : i32
    %c0_i32_0 = arith.constant 0 : i32
    %c0_i32_1 = arith.constant 0 : i32
    return %arg1, %c0_i32, %c0_i32_0 : i32, i32, i32
  }
  func.func @transform_2(%arg0: i32, %arg1: i32) -> (i32, i32, i32) {
    %c0_i32 = arith.constant 0 : i32
    %c0_i32_0 = arith.constant 0 : i32
    %c0_i32_1 = arith.constant 0 : i32
    return %arg1, %c0_i32, %c0_i32_0 : i32, i32, i32
  }
  func.func @transform_3(%arg0: i32, %arg1: i32) -> (i32, i32, i32) {
    %c0_i32 = arith.constant 0 : i32
    %c0_i32_0 = arith.constant 0 : i32
    %c0_i32_1 = arith.constant 0 : i32
    return %arg1, %c0_i32, %c0_i32_0 : i32, i32, i32
  }
  func.func @transform_4(%arg0: i32, %arg1: i32) -> (i32, i32, i32) {
    %c0_i32 = arith.constant 0 : i32
    %c0_i32_0 = arith.constant 0 : i32
    %c0_i32_1 = arith.constant 0 : i32
    return %arg1, %c0_i32, %c0_i32_0 : i32, i32, i32
  }
  func.func @transform_5(%arg0: i32, %arg1: i32) -> (i32, i32, i32) {
    %c0_i32 = arith.constant 0 : i32
    %c0_i32_0 = arith.constant 0 : i32
    %c0_i32_1 = arith.constant 0 : i32
    return %arg1, %c0_i32, %c0_i32_0 : i32, i32, i32
  }
  func.func @transform_6(%arg0: i32, %arg1: i32) -> (i32, i32, i32) {
    %c0_i32 = arith.constant 0 : i32
    %c0_i32_0 = arith.constant 0 : i32
    %c0_i32_1 = arith.constant 0 : i32
    return %arg1, %c0_i32, %c0_i32_0 : i32, i32, i32
  }
  func.func @transform_7(%arg0: i32, %arg1: i32) -> (i32, i32, i32) {
    %c0_i32 = arith.constant 0 : i32
    %c0_i32_0 = arith.constant 0 : i32
    %c0_i32_1 = arith.constant 0 : i32
    return %arg1, %c0_i32, %c0_i32_0 : i32, i32, i32
  }
  func.func @transform_8(%arg0: i32, %arg1: i32) -> (i32, i32, i32) {
    %c0_i32 = arith.constant 0 : i32
    %c0_i32_0 = arith.constant 0 : i32
    %c0_i32_1 = arith.constant 0 : i32
    return %arg0, %c0_i32, %c0_i32_0 : i32, i32, i32
  }
}

</mosaic_0001>

<llo_original>
// kernel: tpu_custom_call.1
$region0: #{tpu_custom_call.1}
  #allocation0 [shape = 'u32[]', space=smem, size = 0x4, offset = 0x4, fixed_abs, tag = 'smem constant byte address 0x4 - core index']
  #allocation1 [shape = 'u32[144,128]{1,0:T(1,128)}', space=vmem, size = 0x12000, scoped, tag = 'internal scratch']
  #allocation2 [shape = 'f32[64,32]{1,0:T(8,128)}', space=vmem, size = 0x8000, scoped, tag = 'scratch operand']
  %s0 = inlined_call_operand.vmem [shape: f32[4,16,32], index: 0, kind: input, shape index: {}]
  %s1 = inlined_call_operand.vmem [shape: bf16[4,32,96], index: 1, kind: input, shape index: {}]
  %s2 = inlined_call_operand.vmem [shape: f32[4,1,96], index: 2, kind: input, shape index: {}]
  %s3 = inlined_call_operand.vmem [shape: bf16[4,32,32], index: 3, kind: input, shape index: {}]
  %s4 = inlined_call_operand.vmem [shape: bf16[4,32,128], index: 4, kind: input, shape index: {}]
  %s5 = inlined_call_operand.vmem [shape: f32[4,1,128], index: 5, kind: input, shape index: {}]
  %s6 = inlined_call_operand.vmem [shape: bf16[4,128,32], index: 6, kind: input, shape index: {}]
  %s7 = inlined_call_operand.vmem [shape: f32[4,8,32], index: 7, kind: input, shape index: {}]
  %s8 = inlined_call_operand.hbm [shape: f32[4,16,32], index: 8, kind: output, shape index: {}]
  %s9 = sld [smem:[#allocation0]]
  $region77: #{tpu_custom_call.1} parent=0
    _
  %s11 = ssub.s32 1, %s9
  %s12 = scalar_select 0, %s11, %s9
  $region1: #{tpu_custom_call.1} parent=0
    #allocation3 [shape = 'u8[32768]{0}', space=vmem, size = 0x8000, scoped, tag = 'output window, operand 0, single buffered']
    #allocation4 [shape = 's32[2]{0}', space=sflag, size = 0x8, scoped, tag = 'scoped memory for tpu_custom_call.1']
    %13 = vsyncpa [#allocation4], 0
    loop: start=0, step=1, limit=6
    $region2: #{tpu_custom_call.1} parent=1 // loop_pre_header
      _
    $region3: #{tpu_custom_call.1} parent=1 // loop_header
      %s15 = sphi 0, %s19
      %p16 = scmp.ge.s32.totalorder %s15, 6
      %s22 = sphi 0, %s34
      %s23 = sphi 0, %s30
      %s24 = sphi 0, %s22
      %s25 = sphi 0, %s23
      %s26 = sphi 0, %s24
      %s27 = sphi 0, %s25
      %s37 = sphi 0, %s39
      %s40 = sphi 0, %s37
      %s41 = sphi 0, %s40
      %s57 = sphi 0, %s41
      %s63 = sphi 0, %s65
      %s66 = sphi 0, %s63
      %s67 = sphi 0, %s66
      %s83 = sphi 0, %s67
      %s89 = sphi 0, %s91
      %s92 = sphi 0, %s89
      %s93 = sphi 0, %s92
      %s109 = sphi 0, %s93
      %s115 = sphi 0, %s117
      %s118 = sphi 0, %s115
      %s119 = sphi 0, %s118
      %s135 = sphi 0, %s119
      %s141 = sphi 0, %s143
      %s144 = sphi 0, %s141
      %s145 = sphi 0, %s144
      %s161 = sphi 0, %s145
      %s167 = sphi 0, %s169
      %s170 = sphi 0, %s167
      %s171 = sphi 0, %s170
      %s187 = sphi 0, %s171
      %s193 = sphi 0, %s195
      %s196 = sphi 0, %s193
      %s197 = sphi 0, %s196
      %s213 = sphi 0, %s197
      %s219 = sphi 0, %s221
      %s222 = sphi 0, %s219
      %s223 = sphi 0, %s222
      %s239 = sphi 0, %s223
      %s245 = sphi 0, %s247
      %s248 = sphi 0, %s245
      %s249 = sphi 0, %s248
      %s265 = sphi 0, %s249
    $region4: #{tpu_custom_call.1} parent=1 // loop_header_branch
      %18 = sbr.rel (%p16) target = $region8
    $region5: #{tpu_custom_call.1} parent=1 // loop_body
      %s20 = ssub.s32 %s15, 1
      %s21 = ssub.s32 %s15, 2
      %s28 = sadd.s32 1, %s23
      %p29 = scmp.ge.s32.totalorder %s28, 4
      %s30 = scalar_select %p29, 0, %s28
      %s31 = sadd.s32 1, %s22
      %s32 = scalar_select %p29, %s31, %s22
      %p33 = scmp.ge.s32.totalorder %s32, 1
      %s34 = scalar_select %p33, 0, %s32
      %s35 = ssub.s32 %s22, %s34
      %p36 = scmp.eq.s32.totalorder %s35, 0
      %s38 = sadd.s32 %s37, 1
      %s39 = scalar_select %p36, %s37, %s38
      %p42 = pneg %p36
      %p43 = scmp.eq.s32.totalorder %s15, 3
      %p44 = por %p42, %p43
      %p45 = scmp.ne.s32.totalorder %s37, %s40
      %p46 = scmp.eq.s32.totalorder %s15, 0
      %p47 = por %p45, %p46
      %p48 = scmp.ne.s32.totalorder %s37, %s40
      %p49 = scmp.eq.s32.totalorder %s20, 3
      %p50 = por %p48, %p49
      %p51 = scmp.ne.s32.totalorder %s40, %s41
      %p52 = scmp.eq.s32.totalorder %s20, 0
      %p53 = por %p51, %p52
      %p54 = scmp.ne.s32.totalorder %s40, %s41
      %p55 = scmp.eq.s32.totalorder %s21, 3
      %p56 = por %p54, %p55
      %p58 = scmp.ne.s32.totalorder %s41, %s57
      %p59 = scmp.eq.s32.totalorder %s21, 0
      %p60 = por %p58, %p59
      %s61 = ssub.s32 %s23, %s30
      %p62 = scmp.eq.s32.totalorder %s61, 0
      %s64 = sadd.s32 %s63, 1
      %s65 = scalar_select %p62, %s63, %s64
      %p68 = pneg %p62
      %p69 = scmp.eq.s32.totalorder %s15, 3
      %p70 = por %p68, %p69
      %p71 = scmp.ne.s32.totalorder %s63, %s66
      %p72 = scmp.eq.s32.totalorder %s15, 0
      %p73 = por %p71, %p72
      %p74 = scmp.ne.s32.totalorder %s63, %s66
      %p75 = scmp.eq.s32.totalorder %s20, 3
      %p76 = por %p74, %p75
      %p77 = scmp.ne.s32.totalorder %s66, %s67
      %p78 = scmp.eq.s32.totalorder %s20, 0
      %p79 = por %p77, %p78
      %p80 = scmp.ne.s32.totalorder %s66, %s67
      %p81 = scmp.eq.s32.totalorder %s21, 3
      %p82 = por %p80, %p81
      %p84 = scmp.ne.s32.totalorder %s67, %s83
      %p85 = scmp.eq.s32.totalorder %s21, 0
      %p86 = por %p84, %p85
      %s87 = ssub.s32 %s23, %s30
      %p88 = scmp.eq.s32.totalorder %s87, 0
      %s90 = sadd.s32 %s89, 1
      %s91 = scalar_select %p88, %s89, %s90
      %p94 = pneg %p88
      %p95 = scmp.eq.s32.totalorder %s15, 3
      %p96 = por %p94, %p95
      %p97 = scmp.ne.s32.totalorder %s89, %s92
      %p98 = scmp.eq.s32.totalorder %s15, 0
      %p99 = por %p97, %p98
      %p100 = scmp.ne.s32.totalorder %s89, %s92
      %p101 = scmp.eq.s32.totalorder %s20, 3
      %p102 = por %p100, %p101
      %p103 = scmp.ne.s32.totalorder %s92, %s93
      %p104 = scmp.eq.s32.totalorder %s20, 0
      %p105 = por %p103, %p104
      %p106 = scmp.ne.s32.totalorder %s92, %s93
      %p107 = scmp.eq.s32.totalorder %s21, 3
      %p108 = por %p106, %p107
      %p110 = scmp.ne.s32.totalorder %s93, %s109
      %p111 = scmp.eq.s32.totalorder %s21, 0
      %p112 = por %p110, %p111
      %s113 = ssub.s32 %s23, %s30
      %p114 = scmp.eq.s32.totalorder %s113, 0
      %s116 = sadd.s32 %s115, 1
      %s117 = scalar_select %p114, %s115, %s116
      %p120 = pneg %p114
      %p121 = scmp.eq.s32.totalorder %s15, 3
      %p122 = por %p120, %p121
      %p123 = scmp.ne.s32.totalorder %s115, %s118
      %p124 = scmp.eq.s32.totalorder %s15, 0
      %p125 = por %p123, %p124
      %p126 = scmp.ne.s32.totalorder %s115, %s118
      %p127 = scmp.eq.s32.totalorder %s20, 3
      %p128 = por %p126, %p127
      %p129 = scmp.ne.s32.totalorder %s118, %s119
      %p130 = scmp.eq.s32.totalorder %s20, 0
      %p131 = por %p129, %p130
      %p132 = scmp.ne.s32.totalorder %s118, %s119
      %p133 = scmp.eq.s32.totalorder %s21, 3
      %p134 = por %p132, %p133
      %p136 = scmp.ne.s32.totalorder %s119, %s135
      %p137 = scmp.eq.s32.totalorder %s21, 0
      %p138 = por %p136, %p137
      %s139 = ssub.s32 %s23, %s30
      %p140 = scmp.eq.s32.totalorder %s139, 0
      %s142 = sadd.s32 %s141, 1
      %s143 = scalar_select %p140, %s141, %s142
      %p146 = pneg %p140
      %p147 = scmp.eq.s32.totalorder %s15, 3
      %p148 = por %p146, %p147
      %p149 = scmp.ne.s32.totalorder %s141, %s144
      %p150 = scmp.eq.s32.totalorder %s15, 0
      %p151 = por %p149, %p150
      %p152 = scmp.ne.s32.totalorder %s141, %s144
      %p153 = scmp.eq.s32.totalorder %s20, 3
      %p154 = por %p152, %p153
      %p155 = scmp.ne.s32.totalorder %s144, %s145
      %p156 = scmp.eq.s32.totalorder %s20, 0
      %p157 = por %p155, %p156
      %p158 = scmp.ne.s32.totalorder %s144, %s145
      %p159 = scmp.eq.s32.totalorder %s21, 3
      %p160 = por %p158, %p159
      %p162 = scmp.ne.s32.totalorder %s145, %s161
      %p163 = scmp.eq.s32.totalorder %s21, 0
      %p164 = por %p162, %p163
      %s165 = ssub.s32 %s23, %s30
      %p166 = scmp.eq.s32.totalorder %s165, 0
      %s168 = sadd.s32 %s167, 1
      %s169 = scalar_select %p166, %s167, %s168
      %p172 = pneg %p166
      %p173 = scmp.eq.s32.totalorder %s15, 3
      %p174 = por %p172, %p173
      %p175 = scmp.ne.s32.totalorder %s167, %s170
      %p176 = scmp.eq.s32.totalorder %s15, 0
      %p177 = por %p175, %p176
      %p178 = scmp.ne.s32.totalorder %s167, %s170
      %p179 = scmp.eq.s32.totalorder %s20, 3
      %p180 = por %p178, %p179
      %p181 = scmp.ne.s32.totalorder %s170, %s171
      %p182 = scmp.eq.s32.totalorder %s20, 0
      %p183 = por %p181, %p182
      %p184 = scmp.ne.s32.totalorder %s170, %s171
      %p185 = scmp.eq.s32.totalorder %s21, 3
      %p186 = por %p184, %p185
      %p188 = scmp.ne.s32.totalorder %s171, %s187
      %p189 = scmp.eq.s32.totalorder %s21, 0
      %p190 = por %p188, %p189
      %s191 = ssub.s32 %s23, %s30
      %p192 = scmp.eq.s32.totalorder %s191, 0
      %s194 = sadd.s32 %s193, 1
      %s195 = scalar_select %p192, %s193, %s194
      %p198 = pneg %p192
      %p199 = scmp.eq.s32.totalorder %s15, 3
      %p200 = por %p198, %p199
      %p201 = scmp.ne.s32.totalorder %s193, %s196
      %p202 = scmp.eq.s32.totalorder %s15, 0
      %p203 = por %p201, %p202
      %p204 = scmp.ne.s32.totalorder %s193, %s196
      %p205 = scmp.eq.s32.totalorder %s20, 3
      %p206 = por %p204, %p205
      %p207 = scmp.ne.s32.totalorder %s196, %s197
      %p208 = scmp.eq.s32.totalorder %s20, 0
      %p209 = por %p207, %p208
      %p210 = scmp.ne.s32.totalorder %s196, %s197
      %p211 = scmp.eq.s32.totalorder %s21, 3
      %p212 = por %p210, %p211
      %p214 = scmp.ne.s32.totalorder %s197, %s213
      %p215 = scmp.eq.s32.totalorder %s21, 0
      %p216 = por %p214, %p215
      %s217 = ssub.s32 %s23, %s30
      %p218 = scmp.eq.s32.totalorder %s217, 0
      %s220 = sadd.s32 %s219, 1
      %s221 = scalar_select %p218, %s219, %s220
      %p224 = pneg %p218
      %p225 = scmp.eq.s32.totalorder %s15, 3
      %p226 = por %p224, %p225
      %p227 = scmp.ne.s32.totalorder %s219, %s222
      %p228 = scmp.eq.s32.totalorder %s15, 0
      %p229 = por %p227, %p228
      %p230 = scmp.ne.s32.totalorder %s219, %s222
      %p231 = scmp.eq.s32.totalorder %s20, 3
      %p232 = por %p230, %p231
      %p233 = scmp.ne.s32.totalorder %s222, %s223
      %p234 = scmp.eq.s32.totalorder %s20, 0
      %p235 = por %p233, %p234
      %p236 = scmp.ne.s32.totalorder %s222, %s223
      %p237 = scmp.eq.s32.totalorder %s21, 3
      %p238 = por %p236, %p237
      %p240 = scmp.ne.s32.totalorder %s223, %s239
      %p241 = scmp.eq.s32.totalorder %s21, 0
      %p242 = por %p240, %p241
      %s243 = ssub.s32 %s22, %s34
      %p244 = scmp.eq.s32.totalorder %s243, 0
      %s246 = sadd.s32 %s245, 1
      %s247 = scalar_select %p244, %s245, %s246
      %p250 = pneg %p244
      %p251 = scmp.eq.s32.totalorder %s15, 3
      %p252 = por %p250, %p251
      %p253 = scmp.ne.s32.totalorder %s245, %s248
      %p254 = scmp.eq.s32.totalorder %s15, 0
      %p255 = por %p253, %p254
      %p256 = scmp.ne.s32.totalorder %s245, %s248
      %p257 = scmp.eq.s32.totalorder %s20, 3
      %p258 = por %p256, %p257
      %p259 = scmp.ne.s32.totalorder %s248, %s249
      %p260 = scmp.eq.s32.totalorder %s20, 0
      %p261 = por %p259, %p260
      %p262 = scmp.ne.s32.totalorder %s248, %s249
      %p263 = scmp.eq.s32.totalorder %s21, 3
      %p264 = por %p262, %p263
      %p266 = scmp.ne.s32.totalorder %s249, %s265
      %p267 = scmp.eq.s32.totalorder %s21, 0
      %p268 = por %p266, %p267
      %p269 = scmp.le.s32.totalorder 1, %s15
      %p270 = scmp.lt.s32.totalorder %s15, 5
      %p271 = pnand %p269, %p270
      %p272 = pneg %p271
      // Predicated region
      $region9: #{tpu_custom_call.1} parent=5 // pred_check
        _
      $region10: #{tpu_custom_call.1} parent=5 // pred_check_branch
        %274 = sbr.rel (%p271) target = $region12
      $region11: #{tpu_custom_call.1} parent=5 // pred_region
        %s275 = ssub.s32 %s15, 1
        // Predicated region
        $region13: #{tpu_custom_call.1} parent=11 // pred_check
          %p276 = pneg %p53
        $region14: #{tpu_custom_call.1} parent=11 // pred_check_branch
          %278 = sbr.rel (%p276) target = $region16
        $region15: #{tpu_custom_call.1} parent=11 // pred_region
          %s279 = smul.u32 4, %s24
          %p280 = scmp.lt.s32.totalorder %s279, 3
          %s281 = scalar_select %p280, %s279, 3
          %s282 = smul.addr %s281, 2
          %s283 = smul.addr %s282, 8
          %s284 = scalar_lea.vmem %s0, %s283
          %s285 = smul.u32 4, %s24
        $region16: #{tpu_custom_call.1} parent=11 // pred_fallthru
          _
      $region12: #{tpu_custom_call.1} parent=5 // pred_fallthru
        _
      %p286 = scmp.lt.s32.totalorder %s15, 4
      // Predicated region
      $region17: #{tpu_custom_call.1} parent=5 // pred_check
        %p287 = pneg %p286
      $region18: #{tpu_custom_call.1} parent=5 // pred_check_branch
        %289 = sbr.rel (%p287) target = $region20
      $region19: #{tpu_custom_call.1} parent=5 // pred_region
        // Predicated region
        $region21: #{tpu_custom_call.1} parent=19 // pred_check
          %p290 = pneg %p73
        $region22: #{tpu_custom_call.1} parent=19 // pred_check_branch
          %292 = sbr.rel (%p290) target = $region24
        $region23: #{tpu_custom_call.1} parent=19 // pred_region
          %p293 = scmp.lt.s32.totalorder %s23, 3
          %s294 = scalar_select %p293, %s23, 3
          %s295 = smul.addr %s294, 4
          %s296 = smul.addr %s295, 4
          %s297 = scalar_lea.vmem %s1, %s296
        $region24: #{tpu_custom_call.1} parent=19 // pred_fallthru
          _
        // Predicated region
        $region25: #{tpu_custom_call.1} parent=19 // pred_check
          %p298 = pneg %p99
        $region26: #{tpu_custom_call.1} parent=19 // pred_check_branch
          %300 = sbr.rel (%p298) target = $region28
        $region27: #{tpu_custom_call.1} parent=19 // pred_region
          %p301 = scmp.lt.s32.totalorder %s23, 3
          %s302 = scalar_select %p301, %s23, 3
          %s303 = scalar_lea.vmem %s2, %s302
        $region28: #{tpu_custom_call.1} parent=19 // pred_fallthru
          _
        // Predicated region
        $region29: #{tpu_custom_call.1} parent=19 // pred_check
          %p304 = pneg %p125
        $region30: #{tpu_custom_call.1} parent=19 // pred_check_branch
          %306 = sbr.rel (%p304) target = $region32
        $region31: #{tpu_custom_call.1} parent=19 // pred_region
          %p307 = scmp.lt.s32.totalorder %s23, 3
          %s308 = scalar_select %p307, %s23, 3
          %s309 = smul.addr %s308, 4
          %s310 = smul.addr %s309, 4
          %s311 = scalar_lea.vmem %s3, %s310
        $region32: #{tpu_custom_call.1} parent=19 // pred_fallthru
          _
        // Predicated region
        $region33: #{tpu_custom_call.1} parent=19 // pred_check
          %p312 = pneg %p151
        $region34: #{tpu_custom_call.1} parent=19 // pred_check_branch
          %314 = sbr.rel (%p312) target = $region36
        $region35: #{tpu_custom_call.1} parent=19 // pred_region
          %p315 = scmp.lt.s32.totalorder %s23, 3
          %s316 = scalar_select %p315, %s23, 3
          %s317 = smul.addr %s316, 4
          %s318 = smul.addr %s317, 4
          %s319 = scalar_lea.vmem %s4, %s318
        $region36: #{tpu_custom_call.1} parent=19 // pred_fallthru
          _
        // Predicated region
        $region37: #{tpu_custom_call.1} parent=19 // pred_check
          %p320 = pneg %p177
        $region38: #{tpu_custom_call.1} parent=19 // pred_check_branch
          %322 = sbr.rel (%p320) target = $region40
        $region39: #{tpu_custom_call.1} parent=19 // pred_region
          %p323 = scmp.lt.s32.totalorder %s23, 3
          %s324 = scalar_select %p323, %s23, 3
          %s325 = scalar_lea.vmem %s5, %s324
        $region40: #{tpu_custom_call.1} parent=19 // pred_fallthru
          _
        // Predicated region
        $region41: #{tpu_custom_call.1} parent=19 // pred_check
          %p326 = pneg %p203
        $region42: #{tpu_custom_call.1} parent=19 // pred_check_branch
          %328 = sbr.rel (%p326) target = $region44
        $region43: #{tpu_custom_call.1} parent=19 // pred_region
          %p329 = scmp.lt.s32.totalorder %s23, 3
          %s330 = scalar_select %p329, %s23, 3
          %s331 = smul.addr %s330, 16
          %s332 = smul.addr %s331, 4
          %s333 = scalar_lea.vmem %s6, %s332
        $region44: #{tpu_custom_call.1} parent=19 // pred_fallthru
          _
        // Predicated region
        $region45: #{tpu_custom_call.1} parent=19 // pred_check
          %p334 = pneg %p229
        $region46: #{tpu_custom_call.1} parent=19 // pred_check_branch
          %336 = sbr.rel (%p334) target = $region48
        $region47: #{tpu_custom_call.1} parent=19 // pred_region
          %p337 = scmp.lt.s32.totalorder %s23, 3
          %s338 = scalar_select %p337, %s23, 3
          %s339 = smul.addr %s338, 8
          %s340 = scalar_lea.vmem %s7, %s339
        $region48: #{tpu_custom_call.1} parent=19 // pred_fallthru
          _
      $region20: #{tpu_custom_call.1} parent=5 // pred_fallthru
        _
      %p341 = scmp.le.s32.totalorder 1, %s15
      %p342 = scmp.lt.s32.totalorder %s15, 5
      %p343 = pnand %p341, %p342
      %p344 = pneg %p343
      // Predicated region
      $region49: #{tpu_custom_call.1} parent=5 // pred_check
        _
      $region50: #{tpu_custom_call.1} parent=5 // pred_check_branch
        %346 = sbr.rel (%p343) target = $region52
      $region51: #{tpu_custom_call.1} parent=5 // pred_region
        %s347 = ssub.s32 %s15, 1
        %s348 = smul.u32 4, %s24
        %p349 = scmp.lt.s32.totalorder %s348, 3
        %s350 = scalar_select %p349, %s348, 3
        %s351 = smul.addr %s350, 2
        %s352 = smul.addr %s351, 8
        %s353 = scalar_lea.vmem %s0, %s352
        %p354 = pneg %p53
        %p355 = pneg %p50
        %p356 = scmp.lt.s32.totalorder %s25, 3
        %s357 = scalar_select %p356, %s25, 3
        %s358 = smul.addr %s357, 4
        %s359 = smul.addr %s358, 4
        %s360 = scalar_lea.vmem %s1, %s359
        %p361 = pneg %p79
        %p362 = pneg %p76
        %p363 = scmp.lt.s32.totalorder %s25, 3
        %s364 = scalar_select %p363, %s25, 3
        %s365 = scalar_lea.vmem %s2, %s364
        %p366 = pneg %p105
        %p367 = pneg %p102
        %p368 = scmp.lt.s32.totalorder %s25, 3
        %s369 = scalar_select %p368, %s25, 3
        %s370 = smul.addr %s369, 4
        %s371 = smul.addr %s370, 4
        %s372 = scalar_lea.vmem %s3, %s371
        %p373 = pneg %p131
        %p374 = pneg %p128
        %p375 = scmp.lt.s32.totalorder %s25, 3
        %s376 = scalar_select %p375, %s25, 3
        %s377 = smul.addr %s376, 4
        %s378 = smul.addr %s377, 4
        %s379 = scalar_lea.vmem %s4, %s378
        %p380 = pneg %p157
        %p381 = pneg %p154
        %p382 = scmp.lt.s32.totalorder %s25, 3
        %s383 = scalar_select %p382, %s25, 3
        %s384 = scalar_lea.vmem %s5, %s383
        %p385 = pneg %p183
        %p386 = pneg %p180
        %p387 = scmp.lt.s32.totalorder %s25, 3
        %s388 = scalar_select %p387, %s25, 3
        %s389 = smul.addr %s388, 16
        %s390 = smul.addr %s389, 4
        %s391 = scalar_lea.vmem %s6, %s390
        %p392 = pneg %p209
        %p393 = pneg %p206
        %p394 = scmp.lt.s32.totalorder %s25, 3
        %s395 = scalar_select %p394, %s25, 3
        %s396 = smul.addr %s395, 8
        %s397 = scalar_lea.vmem %s7, %s396
        %p398 = pneg %p235
        %p399 = pneg %p232
        %p400 = pneg %p261
        %p401 = pneg %p258
        %s402 = smul.u32 4, %s24
        %p403 = scmp.lt.s32.totalorder %s402, 3
        %s404 = scalar_select %p403, %s402, 3
        %s405 = smul.addr %s404, 2
        %s406 = smul.addr %s405, 8
        %s407 = scalar_lea.vmem %s0, %s406
        %s408 = smul.u32 4, %s24
        %p409 = scmp.lt.s32.totalorder %s25, 3
        %s410 = scalar_select %p409, %s25, 3
        %s411 = smul.addr %s410, 4
        %s412 = smul.addr %s411, 4
        %s413 = scalar_lea.vmem %s1, %s412
        %p414 = scmp.lt.s32.totalorder %s25, 3
        %s415 = scalar_select %p414, %s25, 3
        %s416 = scalar_lea.vmem %s2, %s415
        %p417 = scmp.lt.s32.totalorder %s25, 3
        %s418 = scalar_select %p417, %s25, 3
        %s419 = smul.addr %s418, 4
        %s420 = smul.addr %s419, 4
        %s421 = scalar_lea.vmem %s3, %s420
        %p422 = scmp.lt.s32.totalorder %s25, 3
        %s423 = scalar_select %p422, %s25, 3
        %s424 = smul.addr %s423, 4
        %s425 = smul.addr %s424, 4
        %s426 = scalar_lea.vmem %s4, %s425
        %p427 = scmp.lt.s32.totalorder %s25, 3
        %s428 = scalar_select %p427, %s25, 3
        %s429 = scalar_lea.vmem %s5, %s428
        %p430 = scmp.lt.s32.totalorder %s25, 3
        %s431 = scalar_select %p430, %s25, 3
        %s432 = smul.addr %s431, 16
        %s433 = smul.addr %s432, 4
        %s434 = scalar_lea.vmem %s6, %s433
        %p435 = scmp.lt.s32.totalorder %s25, 3
        %s436 = scalar_select %p435, %s25, 3
        %s437 = smul.addr %s436, 8
        %s438 = scalar_lea.vmem %s7, %s437
        %s439 = smul.u32 4, %s24
        %p441 = scmp.eq.s32.totalorder %s25, 0
        // Predicated region
        $region53: #{tpu_custom_call.1} parent=51 // pred_check
          %p442 = pneg %p441
        $region54: #{tpu_custom_call.1} parent=51 // pred_check_branch
          %444 = sbr.rel (%p442) target = $region56
        $region55: #{tpu_custom_call.1} parent=51 // pred_region
          %v445 = vld [vmem:[%s407] sm:$0xff]
          %v446 = vld [vmem:[%s407 + $0x8] sm:$0xff]
          %vm447 = vcmask 261120
          %448 = vst.msk [vmem:[#allocation2] sm:$0xff] %vm447, %v445
          %449 = vst.msk [vmem:[#allocation2 + $0x8] sm:$0xff] %vm447, %v446
          %s450 = scalar_lea.vmem %s407, 16
          %v451 = vld [vmem:[%s450] sm:$0xff]
          %v452 = vld [vmem:[%s450 + $0x8] sm:$0xff]
          %453 = vst.msk [vmem:[#allocation2 + $0x10] sm:$0xff] %vm447, %v451
          %454 = vst.msk [vmem:[#allocation2 + $0x18] sm:$0xff] %vm447, %v452
          %s455 = scalar_lea.vmem %s407, 32
          %v456 = vld [vmem:[%s455] sm:$0xff]
          %v457 = vld [vmem:[%s455 + $0x8] sm:$0xff]
          %458 = vst.msk [vmem:[#allocation2 + $0x20] sm:$0xff] %vm447, %v456
          %459 = vst.msk [vmem:[#allocation2 + $0x28] sm:$0xff] %vm447, %v457
          %s460 = scalar_lea.vmem %s407, 48
          %v461 = vld [vmem:[%s460] sm:$0xff]
          %v462 = vld [vmem:[%s460 + $0x8] sm:$0xff]
          %463 = vst.msk [vmem:[#allocation2 + $0x30] sm:$0xff] %vm447, %v461
          %464 = vst.msk [vmem:[#allocation2 + $0x38] sm:$0xff] %vm447, %v462
        $region56: #{tpu_custom_call.1} parent=51 // pred_fallthru
          _
        %v465 = vld [vmem:[#allocation2] sm:$0xff]
        %v466 = vld [vmem:[#allocation2 + $0x8] sm:$0xff]
        %v467 = vld [vmem:[#allocation2 + $0x10] sm:$0xff]
        %v468 = vld [vmem:[#allocation2 + $0x18] sm:$0xff]
        %v469 = vld [vmem:[#allocation2 + $0x20] sm:$0xff]
        %v470 = vld [vmem:[#allocation2 + $0x28] sm:$0xff]
        %v471 = vld [vmem:[#allocation2 + $0x30] sm:$0xff]
        %v472 = vld [vmem:[#allocation2 + $0x38] sm:$0xff]
        %v473 = vld [vmem:[%s438] sm:$0x1]
        %v474 = vld [vmem:[%s438 + $0x1] sm:$0x1]
        %v475 = vld [vmem:[%s438 + $0x2] sm:$0x1]
        %v476 = vld [vmem:[%s438 + $0x3] sm:$0x1]
        %v477 = vld [vmem:[%s438 + $0x4] sm:$0x1]
        %v478 = vld [vmem:[%s438 + $0x5] sm:$0x1]
        %v479 = vld [vmem:[%s413] sm:$0xf]
        %v480 = vld [vmem:[%s413 + $0x4] sm:$0xf]
        %v481 = vld [vmem:[%s413 + $0x8] sm:$0xf]
        %v482 = vld [vmem:[%s413 + $0xc] sm:$0xf]
        %v483 = vpack.c.bf16 %v466, %v465
        %v484 = vpack.c.bf16 %v468, %v467
        %v485 = vpack.c.bf16 %v470, %v469
        %v486 = vpack.c.bf16 %v472, %v471
        %v487 = vld [vmem:[%s416] sm:$0x1]
        %v489 = vlaneseq
        %v490 = vshrl.u32 %v489, 7
        %v491 = vsub.s32 0, %v490
        %v492 = vrot.slane %v487, %v491
        %v498 = vunpack.c.l.b16 %v479
        %v499 = vunpack.c.l.b16 %v480
        %v500 = vunpack.c.l.b16 %v481
        %v501 = vunpack.c.l.b16 %v482
        %v502 = vpack.c.b16 %v499, %v498
        %v503 = vpack.c.b16 %v501, %v500
        %vm506 = vcmask 261120
        %v508 = vsel %vm506, %v483, 0
        %v511 = vsel %vm506, %v484, 0
        %v514 = vsel %vm506, %v485, 0
        %v517 = vsel %vm506, %v486, 0
        %519 = vmatprep.subr.bf16.mxu0 0
        %520 = vmatpush1.bf16.msra.mxu0 %v502
        %521 = vmatprep.subr.bf16.mxu0 0
        %522 = vmatpush1.bf16.msra.mxu0 %v503
        %523 = vmatprep.subr.bf16.mxu0 0
        %524 = vmatpush1.bf16.msra.mxu0 0
        %525 = vmatprep.subr.bf16.mxu0 0
        %526 = vmatpush1.bf16.msra.mxu0 0
        %527 = vmatprep.subr.bf16.mxu0 0
        %528 = vmatpush1.bf16.msra.mxu0 0
        %529 = vmatprep.subr.bf16.mxu0 0
        %530 = vmatpush1.bf16.msra.mxu0 0
        %531 = vmatprep.subr.bf16.mxu0 0
        %532 = vmatpush1.bf16.msra.mxu0 0
        %533 = vmatprep.subr.bf16.mxu0 0
        %534 = vmatpush1.bf16.msra.mxu0 0
        %535 = vmatprep.subr.bf16.mxu0 0
        %536 = vmatpush1.bf16.msra.mxu0 0
        %537 = vmatprep.subr.bf16.mxu0 0
        %538 = vmatpush1.bf16.msra.mxu0 0
        %539 = vmatprep.subr.bf16.mxu0 0
        %540 = vmatpush1.bf16.msra.mxu0 0
        %541 = vmatprep.subr.bf16.mxu0 0
        %542 = vmatpush1.bf16.msra.mxu0 0
        %543 = vmatprep.subr.bf16.mxu0 0
        %544 = vmatpush1.bf16.msra.mxu0 0
        %545 = vmatprep.subr.bf16.mxu0 0
        %546 = vmatpush1.bf16.msra.mxu0 0
        %547 = vmatprep.subr.bf16.mxu0 0
        %548 = vmatpush1.bf16.msra.mxu0 0
        %549 = vmatprep.subr.bf16.mxu0 0
        %550 = vmatpush1.bf16.msra.mxu0 0
        %551 = vmatprep.mubr.bf16.mxu0 0
        %552 = vmatmul.mubr.bf16.gmra.mrb[0].mxu0 %v508
        %v553 = vpop.f32.mrb[0].mxu0
        %v554 = vadd.f32 %v492, %v553
        %v555 = vpop.f32.mrb[0].mxu0
        %v556 = vpop.f32.mrb[0].mxu0
        %v557 = vadd.f32 %v492, %v556
        %v558 = vpop.f32.mrb[0].mxu0
        %559 = vmatprep.mubr.bf16.mxu0 0
        %560 = vmatmul.mubr.bf16.gmra.mrb[0].mxu0 %v511
        %v561 = vpop.f32.mrb[0].mxu0
        %v562 = vadd.f32 %v492, %v561
        %v563 = vpop.f32.mrb[0].mxu0
        %v564 = vpop.f32.mrb[0].mxu0
        %v565 = vadd.f32 %v492, %v564
        %v566 = vpop.f32.mrb[0].mxu0
        %567 = vmatprep.mubr.bf16.mxu0 0
        %568 = vmatmul.mubr.bf16.gmra.mrb[0].mxu0 %v514
        %v569 = vpop.f32.mrb[0].mxu0
        %v570 = vadd.f32 %v492, %v569
        %v571 = vpop.f32.mrb[0].mxu0
        %v572 = vpop.f32.mrb[0].mxu0
        %v573 = vadd.f32 %v492, %v572
        %v574 = vpop.f32.mrb[0].mxu0
        %575 = vmatprep.mubr.bf16.mxu0 0
        %576 = vmatmul.mubr.bf16.gmra.mrb[0].mxu0 %v517
        %v577 = vpop.f32.mrb[0].mxu0
        %v578 = vadd.f32 %v492, %v577
        %v579 = vpop.f32.mrb[0].mxu0
        %v580 = vpop.f32.mrb[0].mxu0
        %v581 = vadd.f32 %v492, %v580
        %v582 = vpop.f32.mrb[0].mxu0
        %583 = vdwg.mxu0
        %v584 = vpack.c.bf16 %v557, %v554
        %v585 = vpack.c.bf16 %v565, %v562
        %v586 = vpack.c.bf16 %v573, %v570
        %v587 = vpack.c.bf16 %v581, %v578
        %589 = vrot.lane.b32.xlu0 %v584, 112
        %v590 = vpop.permute.xlu0 %589
        %592 = vrot.lane.b32.xlu0 %v585, 112
        %v593 = vpop.permute.xlu0 %592
        %595 = vrot.lane.b32.xlu0 %v586, 112
        %v596 = vpop.permute.xlu0 %595
        %598 = vrot.lane.b32.xlu0 %v587, 112
        %v599 = vpop.permute.xlu0 %598
        %600 = vrot.lane.b32.xlu0 %v584, 96
        %v601 = vpop.permute.xlu0 %600
        %vm602 = vcmask 130048
        %v604 = vsel %vm602, %v584, 0
        %v607 = vsel %vm602, %v601, 0
        %609 = vmatprep.subr.bf16.mxu0 0
        %610 = vmatpush1.bf16.xpose.msra.mxu0 %v607
        %611 = vmatprep.subr.bf16.mxu0 0
        %612 = vmatpush1.bf16.xpose.msra.mxu0 0
        %613 = vmatprep.subr.bf16.mxu0 0
        %614 = vmatpush1.bf16.xpose.msra.mxu0 0
        %615 = vmatprep.subr.bf16.mxu0 0
        %616 = vmatpush1.bf16.xpose.msra.mxu0 0
        %617 = vmatprep.subr.bf16.mxu0 0
        %618 = vmatpush1.bf16.xpose.msra.mxu0 0
        %619 = vmatprep.subr.bf16.mxu0 0
        %620 = vmatpush1.bf16.xpose.msra.mxu0 0
        %621 = vmatprep.subr.bf16.mxu0 0
        %622 = vmatpush1.bf16.xpose.msra.mxu0 0
        %623 = vmatprep.subr.bf16.mxu0 0
        %624 = vmatpush1.bf16.xpose.msra.mxu0 0
        %625 = vmatprep.subr.bf16.mxu0 0
        %626 = vmatpush1.bf16.xpose.msra.mxu0 0
        %627 = vmatprep.subr.bf16.mxu0 0
        %628 = vmatpush1.bf16.xpose.msra.mxu0 0
        %629 = vmatprep.subr.bf16.mxu0 0
        %630 = vmatpush1.bf16.xpose.msra.mxu0 0
        %631 = vmatprep.subr.bf16.mxu0 0
        %632 = vmatpush1.bf16.xpose.msra.mxu0 0
        %633 = vmatprep.subr.bf16.mxu0 0
        %634 = vmatpush1.bf16.xpose.msra.mxu0 0
        %635 = vmatprep.subr.bf16.mxu0 0
        %636 = vmatpush1.bf16.xpose.msra.mxu0 0
        %637 = vmatprep.subr.bf16.mxu0 0
        %638 = vmatpush1.bf16.xpose.msra.mxu0 0
        %639 = vmatprep.subr.bf16.mxu0 0
        %640 = vmatpush1.bf16.xpose.msra.mxu0 0
        %641 = vmatprep.mubr.bf16.mxu0 0
        %642 = vmatmul.mubr.bf16.gmra.mrb[0].mxu0 %v604
        %v643 = vpop.f32.mrb[0].mxu0
        %v644 = vadd.f32 0.0, %v643
        %v645 = vpop.f32.mrb[0].mxu0
        %v646 = vpop.f32.mrb[0].mxu0
        %v647 = vadd.f32 0.0, %v646
        %v648 = vpop.f32.mrb[0].mxu0
        %649 = vdwg.mxu0
        %650 = vrot.lane.b32.xlu0 %v590, 96
        %v651 = vpop.permute.xlu0 %650
        %v653 = vsel %vm602, %v590, 0
        %v656 = vsel %vm602, %v651, 0
        %658 = vmatprep.subr.bf16.mxu0 0
        %659 = vmatpush1.bf16.xpose.msra.mxu0 %v656
        %660 = vmatprep.subr.bf16.mxu0 0
        %661 = vmatpush1.bf16.xpose.msra.mxu0 0
        %662 = vmatprep.subr.bf16.mxu0 0
        %663 = vmatpush1.bf16.xpose.msra.mxu0 0
        %664 = vmatprep.subr.bf16.mxu0 0
        %665 = vmatpush1.bf16.xpose.msra.mxu0 0
        %666 = vmatprep.subr.bf16.mxu0 0
        %667 = vmatpush1.bf16.xpose.msra.mxu0 0
        %668 = vmatprep.subr.bf16.mxu0 0
        %669 = vmatpush1.bf16.xpose.msra.mxu0 0
        %670 = vmatprep.subr.bf16.mxu0 0
        %671 = vmatpush1.bf16.xpose.msra.mxu0 0
        %672 = vmatprep.subr.bf16.mxu0 0
        %673 = vmatpush1.bf16.xpose.msra.mxu0 0
        %674 = vmatprep.subr.bf16.mxu0 0
        %675 = vmatpush1.bf16.xpose.msra.mxu0 0
        %676 = vmatprep.subr.bf16.mxu0 0
        %677 = vmatpush1.bf16.xpose.msra.mxu0 0
        %678 = vmatprep.subr.bf16.mxu0 0
        %679 = vmatpush1.bf16.xpose.msra.mxu0 0
        %680 = vmatprep.subr.bf16.mxu0 0
        %681 = vmatpush1.bf16.xpose.msra.mxu0 0
        %682 = vmatprep.subr.bf16.mxu0 0
        %683 = vmatpush1.bf16.xpose.msra.mxu0 0
        %684 = vmatprep.subr.bf16.mxu0 0
        %685 = vmatpush1.bf16.xpose.msra.mxu0 0
        %686 = vmatprep.subr.bf16.mxu0 0
        %687 = vmatpush1.bf16.xpose.msra.mxu0 0
        %688 = vmatprep.subr.bf16.mxu0 0
        %689 = vmatpush1.bf16.xpose.msra.mxu0 0
        %690 = vmatprep.mubr.bf16.mxu0 0
        %691 = vmatmul.mubr.bf16.gmra.mrb[0].mxu0 %v653
        %v692 = vpop.f32.mrb[0].mxu0
        %v693 = vadd.f32 0.0, %v692
        %v694 = vpop.f32.mrb[0].mxu0
        %v695 = vpop.f32.mrb[0].mxu0
        %v696 = vadd.f32 0.0, %v695
        %v697 = vpop.f32.mrb[0].mxu0
        %698 = vdwg.mxu0
        %699 = vrot.lane.b32.xlu0 %v585, 96
        %v700 = vpop.permute.xlu0 %699
        %v702 = vsel %vm602, %v585, 0
        %v705 = vsel %vm602, %v700, 0
        %707 = vmatprep.subr.bf16.mxu0 0
        %708 = vmatpush1.bf16.xpose.msra.mxu0 %v705
        %709 = vmatprep.subr.bf16.mxu0 0
        %710 = vmatpush1.bf16.xpose.msra.mxu0 0
        %711 = vmatprep.subr.bf16.mxu0 0
        %712 = vmatpush1.bf16.xpose.msra.mxu0 0
        %713 = vmatprep.subr.bf16.mxu0 0
        %714 = vmatpush1.bf16.xpose.msra.mxu0 0
        %715 = vmatprep.subr.bf16.mxu0 0
        %716 = vmatpush1.bf16.xpose.msra.mxu0 0
        %717 = vmatprep.subr.bf16.mxu0 0
        %718 = vmatpush1.bf16.xpose.msra.mxu0 0
        %719 = vmatprep.subr.bf16.mxu0 0
        %720 = vmatpush1.bf16.xpose.msra.mxu0 0
        %721 = vmatprep.subr.bf16.mxu0 0
        %722 = vmatpush1.bf16.xpose.msra.mxu0 0
        %723 = vmatprep.subr.bf16.mxu0 0
        %724 = vmatpush1.bf16.xpose.msra.mxu0 0
        %725 = vmatprep.subr.bf16.mxu0 0
        %726 = vmatpush1.bf16.xpose.msra.mxu0 0
        %727 = vmatprep.subr.bf16.mxu0 0
        %728 = vmatpush1.bf16.xpose.msra.mxu0 0
        %729 = vmatprep.subr.bf16.mxu0 0
        %730 = vmatpush1.bf16.xpose.msra.mxu0 0
        %731 = vmatprep.subr.bf16.mxu0 0
        %732 = vmatpush1.bf16.xpose.msra.mxu0 0
        %733 = vmatprep.subr.bf16.mxu0 0
        %734 = vmatpush1.bf16.xpose.msra.mxu0 0
        %735 = vmatprep.subr.bf16.mxu0 0
        %736 = vmatpush1.bf16.xpose.msra.mxu0 0
        %737 = vmatprep.subr.bf16.mxu0 0
        %738 = vmatpush1.bf16.xpose.msra.mxu0 0
        %739 = vmatprep.mubr.bf16.mxu0 0
        %740 = vmatmul.mubr.bf16.gmra.mrb[0].mxu0 %v702
        %v741 = vpop.f32.mrb[0].mxu0
        %v742 = vadd.f32 0.0, %v741
        %v743 = vpop.f32.mrb[0].mxu0
        %v744 = vpop.f32.mrb[0].mxu0
        %v745 = vadd.f32 0.0, %v744
        %v746 = vpop.f32.mrb[0].mxu0
        %747 = vdwg.mxu0
        %748 = vrot.lane.b32.xlu0 %v593, 96
        %v749 = vpop.permute.xlu0 %748
        %v751 = vsel %vm602, %v593, 0
        %v754 = vsel %vm602, %v749, 0
        %756 = vmatprep.subr.bf16.mxu0 0
        %757 = vmatpush1.bf16.xpose.msra.mxu0 %v754
        %758 = vmatprep.subr.bf16.mxu0 0
        %759 = vmatpush1.bf16.xpose.msra.mxu0 0
        %760 = vmatprep.subr.bf16.mxu0 0
        %761 = vmatpush1.bf16.xpose.msra.mxu0 0
        %762 = vmatprep.subr.bf16.mxu0 0
        %763 = vmatpush1.bf16.xpose.msra.mxu0 0
        %764 = vmatprep.subr.bf16.mxu0 0
        %765 = vmatpush1.bf16.xpose.msra.mxu0 0
        %766 = vmatprep.subr.bf16.mxu0 0
        %767 = vmatpush1.bf16.xpose.msra.mxu0 0
        %768 = vmatprep.subr.bf16.mxu0 0
        %769 = vmatpush1.bf16.xpose.msra.mxu0 0
        %770 = vmatprep.subr.bf16.mxu0 0
        %771 = vmatpush1.bf16.xpose.msra.mxu0 0
        %772 = vmatprep.subr.bf16.mxu0 0
        %773 = vmatpush1.bf16.xpose.msra.mxu0 0
        %774 = vmatprep.subr.bf16.mxu0 0
        %775 = vmatpush1.bf16.xpose.msra.mxu0 0
        %776 = vmatprep.subr.bf16.mxu0 0
        %777 = vmatpush1.bf16.xpose.msra.mxu0 0
        %778 = vmatprep.subr.bf16.mxu0 0
        %779 = vmatpush1.bf16.xpose.msra.mxu0 0
        %780 = vmatprep.subr.bf16.mxu0 0
        %781 = vmatpush1.bf16.xpose.msra.mxu0 0
        %782 = vmatprep.subr.bf16.mxu0 0
        %783 = vmatpush1.bf16.xpose.msra.mxu0 0
        %784 = vmatprep.subr.bf16.mxu0 0
        %785 = vmatpush1.bf16.xpose.msra.mxu0 0
        %786 = vmatprep.subr.bf16.mxu0 0
        %787 = vmatpush1.bf16.xpose.msra.mxu0 0
        %788 = vmatprep.mubr.bf16.mxu0 0
        %789 = vmatmul.mubr.bf16.gmra.mrb[0].mxu0 %v751
        %v790 = vpop.f32.mrb[0].mxu0
        %v791 = vadd.f32 0.0, %v790
        %v792 = vpop.f32.mrb[0].mxu0
        %v793 = vpop.f32.mrb[0].mxu0
        %v794 = vadd.f32 0.0, %v793
        %v795 = vpop.f32.mrb[0].mxu0
        %796 = vdwg.mxu0
        %797 = vrot.lane.b32.xlu0 %v586, 96
        %v798 = vpop.permute.xlu0 %797
        %v800 = vsel %vm602, %v586, 0
        %v803 = vsel %vm602, %v798, 0
        %805 = vmatprep.subr.bf16.mxu0 0
        %806 = vmatpush1.bf16.xpose.msra.mxu0 %v803
        %807 = vmatprep.subr.bf16.mxu0 0
        %808 = vmatpush1.bf16.xpose.msra.mxu0 0
        %809 = vmatprep.subr.bf16.mxu0 0
        %810 = vmatpush1.bf16.xpose.msra.mxu0 0
        %811 = vmatprep.subr.bf16.mxu0 0
        %812 = vmatpush1.bf16.xpose.msra.mxu0 0
        %813 = vmatprep.subr.bf16.mxu0 0
        %814 = vmatpush1.bf16.xpose.msra.mxu0 0
        %815 = vmatprep.subr.bf16.mxu0 0
        %816 = vmatpush1.bf16.xpose.msra.mxu0 0
        %817 = vmatprep.subr.bf16.mxu0 0
        %818 = vmatpush1.bf16.xpose.msra.mxu0 0
        %819 = vmatprep.subr.bf16.mxu0 0
        %820 = vmatpush1.bf16.xpose.msra.mxu0 0
        %821 = vmatprep.subr.bf16.mxu0 0
        %822 = vmatpush1.bf16.xpose.msra.mxu0 0
        %823 = vmatprep.subr.bf16.mxu0 0
        %824 = vmatpush1.bf16.xpose.msra.mxu0 0
        %825 = vmatprep.subr.bf16.mxu0 0
        %826 = vmatpush1.bf16.xpose.msra.mxu0 0
        %827 = vmatprep.subr.bf16.mxu0 0
        %828 = vmatpush1.bf16.xpose.msra.mxu0 0
        %829 = vmatprep.subr.bf16.mxu0 0
        %830 = vmatpush1.bf16.xpose.msra.mxu0 0
        %831 = vmatprep.subr.bf16.mxu0 0
        %832 = vmatpush1.bf16.xpose.msra.mxu0 0
        %833 = vmatprep.subr.bf16.mxu0 0
        %834 = vmatpush1.bf16.xpose.msra.mxu0 0
        %835 = vmatprep.subr.bf16.mxu0 0
        %836 = vmatpush1.bf16.xpose.msra.mxu0 0
        %837 = vmatprep.mubr.bf16.mxu0 0
        %838 = vmatmul.mubr.bf16.gmra.mrb[0].mxu0 %v800
        %v839 = vpop.f32.mrb[0].mxu0
        %v840 = vadd.f32 0.0, %v839
        %v841 = vpop.f32.mrb[0].mxu0
        %v842 = vpop.f32.mrb[0].mxu0
        %v843 = vadd.f32 0.0, %v842
        %v844 = vpop.f32.mrb[0].mxu0
        %845 = vdwg.mxu0
        %846 = vrot.lane.b32.xlu0 %v596, 96
        %v847 = vpop.permute.xlu0 %846
        %v849 = vsel %vm602, %v596, 0
        %v852 = vsel %vm602, %v847, 0
        %854 = vmatprep.subr.bf16.mxu0 0
        %855 = vmatpush1.bf16.xpose.msra.mxu0 %v852
        %856 = vmatprep.subr.bf16.mxu0 0
        %857 = vmatpush1.bf16.xpose.msra.mxu0 0
        %858 = vmatprep.subr.bf16.mxu0 0
        %859 = vmatpush1.bf16.xpose.msra.mxu0 0
        %860 = vmatprep.subr.bf16.mxu0 0
        %861 = vmatpush1.bf16.xpose.msra.mxu0 0
        %862 = vmatprep.subr.bf16.mxu0 0
        %863 = vmatpush1.bf16.xpose.msra.mxu0 0
        %864 = vmatprep.subr.bf16.mxu0 0
        %865 = vmatpush1.bf16.xpose.msra.mxu0 0
        %866 = vmatprep.subr.bf16.mxu0 0
        %867 = vmatpush1.bf16.xpose.msra.mxu0 0
        %868 = vmatprep.subr.bf16.mxu0 0
        %869 = vmatpush1.bf16.xpose.msra.mxu0 0
        %870 = vmatprep.subr.bf16.mxu0 0
        %871 = vmatpush1.bf16.xpose.msra.mxu0 0
        %872 = vmatprep.subr.bf16.mxu0 0
        %873 = vmatpush1.bf16.xpose.msra.mxu0 0
        %874 = vmatprep.subr.bf16.mxu0 0
        %875 = vmatpush1.bf16.xpose.msra.mxu0 0
        %876 = vmatprep.subr.bf16.mxu0 0
        %877 = vmatpush1.bf16.xpose.msra.mxu0 0
        %878 = vmatprep.subr.bf16.mxu0 0
        %879 = vmatpush1.bf16.xpose.msra.mxu0 0
        %880 = vmatprep.subr.bf16.mxu0 0
        %881 = vmatpush1.bf16.xpose.msra.mxu0 0
        %882 = vmatprep.subr.bf16.mxu0 0
        %883 = vmatpush1.bf16.xpose.msra.mxu0 0
        %884 = vmatprep.subr.bf16.mxu0 0
        %885 = vmatpush1.bf16.xpose.msra.mxu0 0
        %886 = vmatprep.mubr.bf16.mxu0 0
        %887 = vmatmul.mubr.bf16.gmra.mrb[0].mxu0 %v849
        %v888 = vpop.f32.mrb[0].mxu0
        %v889 = vadd.f32 0.0, %v888
        %v890 = vpop.f32.mrb[0].mxu0
        %v891 = vpop.f32.mrb[0].mxu0
        %v892 = vadd.f32 0.0, %v891
        %v893 = vpop.f32.mrb[0].mxu0
        %894 = vdwg.mxu0
        %895 = vrot.lane.b32.xlu0 %v587, 96
        %v896 = vpop.permute.xlu0 %895
        %v898 = vsel %vm602, %v587, 0
        %v901 = vsel %vm602, %v896, 0
        %903 = vmatprep.subr.bf16.mxu0 0
        %904 = vmatpush1.bf16.xpose.msra.mxu0 %v901
        %905 = vmatprep.subr.bf16.mxu0 0
        %906 = vmatpush1.bf16.xpose.msra.mxu0 0
        %907 = vmatprep.subr.bf16.mxu0 0
        %908 = vmatpush1.bf16.xpose.msra.mxu0 0
        %909 = vmatprep.subr.bf16.mxu0 0
        %910 = vmatpush1.bf16.xpose.msra.mxu0 0
        %911 = vmatprep.subr.bf16.mxu0 0
        %912 = vmatpush1.bf16.xpose.msra.mxu0 0
        %913 = vmatprep.subr.bf16.mxu0 0
        %914 = vmatpush1.bf16.xpose.msra.mxu0 0
        %915 = vmatprep.subr.bf16.mxu0 0
        %916 = vmatpush1.bf16.xpose.msra.mxu0 0
        %917 = vmatprep.subr.bf16.mxu0 0
        %918 = vmatpush1.bf16.xpose.msra.mxu0 0
        %919 = vmatprep.subr.bf16.mxu0 0
        %920 = vmatpush1.bf16.xpose.msra.mxu0 0
        %921 = vmatprep.subr.bf16.mxu0 0
        %922 = vmatpush1.bf16.xpose.msra.mxu0 0
        %923 = vmatprep.subr.bf16.mxu0 0
        %924 = vmatpush1.bf16.xpose.msra.mxu0 0
        %925 = vmatprep.subr.bf16.mxu0 0
        %926 = vmatpush1.bf16.xpose.msra.mxu0 0
        %927 = vmatprep.subr.bf16.mxu0 0
        %928 = vmatpush1.bf16.xpose.msra.mxu0 0
        %929 = vmatprep.subr.bf16.mxu0 0
        %930 = vmatpush1.bf16.xpose.msra.mxu0 0
        %931 = vmatprep.subr.bf16.mxu0 0
        %932 = vmatpush1.bf16.xpose.msra.mxu0 0
        %933 = vmatprep.subr.bf16.mxu0 0
        %934 = vmatpush1.bf16.xpose.msra.mxu0 0
        %935 = vmatprep.mubr.bf16.mxu0 0
        %936 = vmatmul.mubr.bf16.gmra.mrb[0].mxu0 %v898
        %v937 = vpop.f32.mrb[0].mxu0
        %v938 = vadd.f32 0.0, %v937
        %v939 = vpop.f32.mrb[0].mxu0
        %v940 = vpop.f32.mrb[0].mxu0
        %v941 = vadd.f32 0.0, %v940
        %v942 = vpop.f32.mrb[0].mxu0
        %943 = vdwg.mxu0
        %944 = vrot.lane.b32.xlu0 %v599, 96
        %v945 = vpop.permute.xlu0 %944
        %v947 = vsel %vm602, %v599, 0
        %v950 = vsel %vm602, %v945, 0
        %952 = vmatprep.subr.bf16.mxu0 0
        %953 = vmatpush1.bf16.xpose.msra.mxu0 %v950
        %954 = vmatprep.subr.bf16.mxu0 0
        %955 = vmatpush1.bf16.xpose.msra.mxu0 0
        %956 = vmatprep.subr.bf16.mxu0 0
        %957 = vmatpush1.bf16.xpose.msra.mxu0 0
        %958 = vmatprep.subr.bf16.mxu0 0
        %959 = vmatpush1.bf16.xpose.msra.mxu0 0
        %960 = vmatprep.subr.bf16.mxu0 0
        %961 = vmatpush1.bf16.xpose.msra.mxu0 0
        %962 = vmatprep.subr.bf16.mxu0 0
        %963 = vmatpush1.bf16.xpose.msra.mxu0 0
        %964 = vmatprep.subr.bf16.mxu0 0
        %965 = vmatpush1.bf16.xpose.msra.mxu0 0
        %966 = vmatprep.subr.bf16.mxu0 0
        %967 = vmatpush1.bf16.xpose.msra.mxu0 0
        %968 = vmatprep.subr.bf16.mxu0 0
        %969 = vmatpush1.bf16.xpose.msra.mxu0 0
        %970 = vmatprep.subr.bf16.mxu0 0
        %971 = vmatpush1.bf16.xpose.msra.mxu0 0
        %972 = vmatprep.subr.bf16.mxu0 0
        %973 = vmatpush1.bf16.xpose.msra.mxu0 0
        %974 = vmatprep.subr.bf16.mxu0 0
        %975 = vmatpush1.bf16.xpose.msra.mxu0 0
        %976 = vmatprep.subr.bf16.mxu0 0
        %977 = vmatpush1.bf16.xpose.msra.mxu0 0
        %978 = vmatprep.subr.bf16.mxu0 0
        %979 = vmatpush1.bf16.xpose.msra.mxu0 0
        %980 = vmatprep.subr.bf16.mxu0 0
        %981 = vmatpush1.bf16.xpose.msra.mxu0 0
        %982 = vmatprep.subr.bf16.mxu0 0
        %983 = vmatpush1.bf16.xpose.msra.mxu0 0
        %984 = vmatprep.mubr.bf16.mxu0 0
        %985 = vmatmul.mubr.bf16.gmra.mrb[0].mxu0 %v947
        %v986 = vpop.f32.mrb[0].mxu0
        %v987 = vadd.f32 0.0, %v986
        %v988 = vpop.f32.mrb[0].mxu0
        %v989 = vpop.f32.mrb[0].mxu0
        %v990 = vadd.f32 0.0, %v989
        %v991 = vpop.f32.mrb[0].mxu0
        %992 = vdwg.mxu0
        %v993 = vsel %vm602, %v644, -inf
        %994 = vmax.xlane.f32.xlu0 %v993
        %v995 = vpop.xlane.xlu0 %994
        %v996 = vsel %vm602, %v647, -inf
        %997 = vmax.xlane.f32.xlu0 %v996
        %v998 = vpop.xlane.xlu0 %997
        %v999 = vsel %vm602, %v693, -inf
        %1000 = vmax.xlane.f32.xlu0 %v999
        %v1001 = vpop.xlane.xlu0 %1000
        %v1002 = vsel %vm602, %v696, -inf
        %1003 = vmax.xlane.f32.xlu0 %v1002
        %v1004 = vpop.xlane.xlu0 %1003
        %v1005 = vsel %vm602, %v742, -inf
        %1006 = vmax.xlane.f32.xlu0 %v1005
        %v1007 = vpop.xlane.xlu0 %1006
        %v1008 = vsel %vm602, %v745, -inf
        %1009 = vmax.xlane.f32.xlu0 %v1008
        %v1010 = vpop.xlane.xlu0 %1009
        %v1011 = vsel %vm602, %v791, -inf
        %1012 = vmax.xlane.f32.xlu0 %v1011
        %v1013 = vpop.xlane.xlu0 %1012
        %v1014 = vsel %vm602, %v794, -inf
        %1015 = vmax.xlane.f32.xlu0 %v1014
        %v1016 = vpop.xlane.xlu0 %1015
        %v1017 = vsel %vm602, %v840, -inf
        %1018 = vmax.xlane.f32.xlu0 %v1017
        %v1019 = vpop.xlane.xlu0 %1018
        %v1020 = vsel %vm602, %v843, -inf
        %1021 = vmax.xlane.f32.xlu0 %v1020
        %v1022 = vpop.xlane.xlu0 %1021
        %v1023 = vsel %vm602, %v889, -inf
        %1024 = vmax.xlane.f32.xlu0 %v1023
        %v1025 = vpop.xlane.xlu0 %1024
        %v1026 = vsel %vm602, %v892, -inf
        %1027 = vmax.xlane.f32.xlu0 %v1026
        %v1028 = vpop.xlane.xlu0 %1027
        %v1029 = vsel %vm602, %v938, -inf
        %1030 = vmax.xlane.f32.xlu0 %v1029
        %v1031 = vpop.xlane.xlu0 %1030
        %v1032 = vsel %vm602, %v941, -inf
        %1033 = vmax.xlane.f32.xlu0 %v1032
        %v1034 = vpop.xlane.xlu0 %1033
        %v1035 = vsel %vm602, %v987, -inf
        %1036 = vmax.xlane.f32.xlu0 %v1035
        %v1037 = vpop.xlane.xlu0 %1036
        %v1038 = vsel %vm602, %v990, -inf
        %1039 = vmax.xlane.f32.xlu0 %v1038
        %v1040 = vpop.xlane.xlu0 %1039
        %v1041 = vsub.f32 %v644, %v995
        %v1042 = vsub.f32 %v647, %v998
        %v1043 = vsub.f32 %v693, %v1001
        %v1044 = vsub.f32 %v696, %v1004
        %v1045 = vsub.f32 %v742, %v1007
        %v1046 = vsub.f32 %v745, %v1010
        %v1047 = vsub.f32 %v791, %v1013
        %v1048 = vsub.f32 %v794, %v1016
        %v1049 = vsub.f32 %v840, %v1019
        %v1050 = vsub.f32 %v843, %v1022
        %v1051 = vsub.f32 %v889, %v1025
        %v1052 = vsub.f32 %v892, %v1028
        %v1053 = vsub.f32 %v938, %v1031
        %v1054 = vsub.f32 %v941, %v1034
        %v1055 = vsub.f32 %v987, %v1037
        %v1056 = vsub.f32 %v990, %v1040
        %v1057 = vmul.f32 %v1041, 1.442695
        %v1058 = vpow.pop %v1057
        %v1059 = vmul.f32 %v1042, 1.442695
        %v1060 = vpow.pop %v1059
        %v1061 = vmul.f32 %v1043, 1.442695
        %v1062 = vpow.pop %v1061
        %v1063 = vmul.f32 %v1044, 1.442695
        %v1064 = vpow.pop %v1063
        %v1065 = vmul.f32 %v1045, 1.442695
        %v1066 = vpow.pop %v1065
        %v1067 = vmul.f32 %v1046, 1.442695
        %v1068 = vpow.pop %v1067
        %v1069 = vmul.f32 %v1047, 1.442695
        %v1070 = vpow.pop %v1069
        %v1071 = vmul.f32 %v1048, 1.442695
        %v1072 = vpow.pop %v1071
        %v1073 = vmul.f32 %v1049, 1.442695
        %v1074 = vpow.pop %v1073
        %v1075 = vmul.f32 %v1050, 1.442695
        %v1076 = vpow.pop %v1075
        %v1077 = vmul.f32 %v1051, 1.442695
        %v1078 = vpow.pop %v1077
        %v1079 = vmul.f32 %v1052, 1.442695
        %v1080 = vpow.pop %v1079
        %v1081 = vmul.f32 %v1053, 1.442695
        %v1082 = vpow.pop %v1081
        %v1083 = vmul.f32 %v1054, 1.442695
        %v1084 = vpow.pop %v1083
        %v1085 = vmul.f32 %v1055, 1.442695
        %v1086 = vpow.pop %v1085
        %v1087 = vmul.f32 %v1056, 1.442695
        %v1088 = vpow.pop %v1087
        %v1089 = vsel %vm602, %v1058, 0.0
        %1090 = vadd.xlane.f32.xlu0 %v1089
        %v1091 = vpop.xlane.xlu0 %1090
        %v1092 = vsel %vm602, %v1060, 0.0
        %1093 = vadd.xlane.f32.xlu0 %v1092
        %v1094 = vpop.xlane.xlu0 %1093
        %v1095 = vsel %vm602, %v1062, 0.0
        %1096 = vadd.xlane.f32.xlu0 %v1095
        %v1097 = vpop.xlane.xlu0 %1096
        %v1098 = vsel %vm602, %v1064, 0.0
        %1099 = vadd.xlane.f32.xlu0 %v1098
        %v1100 = vpop.xlane.xlu0 %1099
        %v1101 = vsel %vm602, %v1066, 0.0
        %1102 = vadd.xlane.f32.xlu0 %v1101
        %v1103 = vpop.xlane.xlu0 %1102
        %v1104 = vsel %vm602, %v1068, 0.0
        %1105 = vadd.xlane.f32.xlu0 %v1104
        %v1106 = vpop.xlane.xlu0 %1105
        %v1107 = vsel %vm602, %v1070, 0.0
        %1108 = vadd.xlane.f32.xlu0 %v1107
        %v1109 = vpop.xlane.xlu0 %1108
        %v1110 = vsel %vm602, %v1072, 0.0
        %1111 = vadd.xlane.f32.xlu0 %v1110
        %v1112 = vpop.xlane.xlu0 %1111
        %v1113 = vsel %vm602, %v1074, 0.0
        %1114 = vadd.xlane.f32.xlu0 %v1113
        %v1115 = vpop.xlane.xlu0 %1114
        %v1116 = vsel %vm602, %v1076, 0.0
        %1117 = vadd.xlane.f32.xlu0 %v1116
        %v1118 = vpop.xlane.xlu0 %1117
        %v1119 = vsel %vm602, %v1078, 0.0
        %1120 = vadd.xlane.f32.xlu0 %v1119
        %v1121 = vpop.xlane.xlu0 %1120
        %v1122 = vsel %vm602, %v1080, 0.0
        %1123 = vadd.xlane.f32.xlu0 %v1122
        %v1124 = vpop.xlane.xlu0 %1123
        %v1125 = vsel %vm602, %v1082, 0.0
        %1126 = vadd.xlane.f32.xlu0 %v1125
        %v1127 = vpop.xlane.xlu0 %1126
        %v1128 = vsel %vm602, %v1084, 0.0
        %1129 = vadd.xlane.f32.xlu0 %v1128
        %v1130 = vpop.xlane.xlu0 %1129
        %v1131 = vsel %vm602, %v1086, 0.0
        %1132 = vadd.xlane.f32.xlu0 %v1131
        %v1133 = vpop.xlane.xlu0 %1132
        %v1134 = vsel %vm602, %v1088, 0.0
        %1135 = vadd.xlane.f32.xlu0 %v1134
        %v1136 = vpop.xlane.xlu0 %1135
        %v1137 = vrcp.pop %v1091
        %v1138 = vrcp.pop %v1094
        %v1139 = vrcp.pop %v1097
        %v1140 = vrcp.pop %v1100
        %v1141 = vrcp.pop %v1103
        %v1142 = vrcp.pop %v1106
        %v1143 = vrcp.pop %v1109
        %v1144 = vrcp.pop %v1112
        %v1145 = vrcp.pop %v1115
        %v1146 = vrcp.pop %v1118
        %v1147 = vrcp.pop %v1121
        %v1148 = vrcp.pop %v1124
        %v1149 = vrcp.pop %v1127
        %v1150 = vrcp.pop %v1130
        %v1151 = vrcp.pop %v1133
        %v1152 = vrcp.pop %v1136
        %v1153 = vmul.f32 %v1058, %v1137
        %v1154 = vmul.f32 %v1060, %v1138
        %v1155 = vmul.f32 %v1062, %v1139
        %v1156 = vmul.f32 %v1064, %v1140
        %v1157 = vmul.f32 %v1066, %v1141
        %v1158 = vmul.f32 %v1068, %v1142
        %v1159 = vmul.f32 %v1070, %v1143
        %v1160 = vmul.f32 %v1072, %v1144
        %v1161 = vmul.f32 %v1074, %v1145
        %v1162 = vmul.f32 %v1076, %v1146
        %v1163 = vmul.f32 %v1078, %v1147
        %v1164 = vmul.f32 %v1080, %v1148
        %v1165 = vmul.f32 %v1082, %v1149
        %v1166 = vmul.f32 %v1084, %v1150
        %v1167 = vmul.f32 %v1086, %v1151
        %v1168 = vmul.f32 %v1088, %v1152
        %v1169 = vpack.c.bf16 %v1154, %v1153
        %v1170 = vpack.c.bf16 %v1156, %v1155
        %v1171 = vpack.c.bf16 %v1158, %v1157
        %v1172 = vpack.c.bf16 %v1160, %v1159
        %v1173 = vpack.c.bf16 %v1162, %v1161
        %v1174 = vpack.c.bf16 %v1164, %v1163
        %v1175 = vpack.c.bf16 %v1166, %v1165
        %v1176 = vpack.c.bf16 %v1168, %v1167
        %1177 = vrot.lane.b32.xlu0 %v584, 64
        %v1178 = vpop.permute.xlu0 %1177
        %v1181 = vsel %vm602, %v1169, 0
        %1183 = vmatprep.subr.bf16.mxu0 0
        %1184 = vmatpush1.bf16.msra.mxu0 %v1178
        %1185 = vmatprep.subr.bf16.mxu0 0
        %1186 = vmatpush1.bf16.msra.mxu0 0
        %1187 = vmatprep.subr.bf16.mxu0 0
        %1188 = vmatpush1.bf16.msra.mxu0 0
        %1189 = vmatprep.subr.bf16.mxu0 0
        %1190 = vmatpush1.bf16.msra.mxu0 0
        %1191 = vmatprep.subr.bf16.mxu0 0
        %1192 = vmatpush1.bf16.msra.mxu0 0
        %1193 = vmatprep.subr.bf16.mxu0 0
        %1194 = vmatpush1.bf16.msra.mxu0 0
        %1195 = vmatprep.subr.bf16.mxu0 0
        %1196 = vmatpush1.bf16.msra.mxu0 0
        %1197 = vmatprep.subr.bf16.mxu0 0
        %1198 = vmatpush1.bf16.msra.mxu0 0
        %1199 = vmatprep.subr.bf16.mxu0 0
        %1200 = vmatpush1.bf16.msra.mxu0 0
        %1201 = vmatprep.subr.bf16.mxu0 0
        %1202 = vmatpush1.bf16.msra.mxu0 0
        %1203 = vmatprep.subr.bf16.mxu0 0
        %1204 = vmatpush1.bf16.msra.mxu0 0
        %1205 = vmatprep.subr.bf16.mxu0 0
        %1206 = vmatpush1.bf16.msra.mxu0 0
        %1207 = vmatprep.subr.bf16.mxu0 0
        %1208 = vmatpush1.bf16.msra.mxu0 0
        %1209 = vmatprep.subr.bf16.mxu0 0
        %1210 = vmatpush1.bf16.msra.mxu0 0
        %1211 = vmatprep.subr.bf16.mxu0 0
        %1212 = vmatpush1.bf16.msra.mxu0 0
        %1213 = vmatprep.subr.bf16.mxu0 0
        %1214 = vmatpush1.bf16.msra.mxu0 0
        %1215 = vmatprep.mubr.bf16.mxu0 0
        %1216 = vmatmul.mubr.bf16.gmra.mrb[0].mxu0 %v1181
        %v1217 = vpop.f32.mrb[0].mxu0
        %v1218 = vadd.f32 0.0, %v1217
        %v1219 = vpop.f32.mrb[0].mxu0
        %v1220 = vpop.f32.mrb[0].mxu0
        %v1221 = vadd.f32 0.0, %v1220
        %v1222 = vpop.f32.mrb[0].mxu0
        %1223 = vdwg.mxu0
        %1224 = vrot.lane.b32.xlu0 %v590, 64
        %v1225 = vpop.permute.xlu0 %1224
        %v1228 = vsel %vm602, %v1170, 0
        %1230 = vmatprep.subr.bf16.mxu0 0
        %1231 = vmatpush1.bf16.msra.mxu0 %v1225
        %1232 = vmatprep.subr.bf16.mxu0 0
        %1233 = vmatpush1.bf16.msra.mxu0 0
        %1234 = vmatprep.subr.bf16.mxu0 0
        %1235 = vmatpush1.bf16.msra.mxu0 0
        %1236 = vmatprep.subr.bf16.mxu0 0
        %1237 = vmatpush1.bf16.msra.mxu0 0
        %1238 = vmatprep.subr.bf16.mxu0 0
        %1239 = vmatpush1.bf16.msra.mxu0 0
        %1240 = vmatprep.subr.bf16.mxu0 0
        %1241 = vmatpush1.bf16.msra.mxu0 0
        %1242 = vmatprep.subr.bf16.mxu0 0
        %1243 = vmatpush1.bf16.msra.mxu0 0
        %1244 = vmatprep.subr.bf16.mxu0 0
        %1245 = vmatpush1.bf16.msra.mxu0 0
        %1246 = vmatprep.subr.bf16.mxu0 0
        %1247 = vmatpush1.bf16.msra.mxu0 0
        %1248 = vmatprep.subr.bf16.mxu0 0
        %1249 = vmatpush1.bf16.msra.mxu0 0
        %1250 = vmatprep.subr.bf16.mxu0 0
        %1251 = vmatpush1.bf16.msra.mxu0 0
        %1252 = vmatprep.subr.bf16.mxu0 0
        %1253 = vmatpush1.bf16.msra.mxu0 0
        %1254 = vmatprep.subr.bf16.mxu0 0
        %1255 = vmatpush1.bf16.msra.mxu0 0
        %1256 = vmatprep.subr.bf16.mxu0 0
        %1257 = vmatpush1.bf16.msra.mxu0 0
        %1258 = vmatprep.subr.bf16.mxu0 0
        %1259 = vmatpush1.bf16.msra.mxu0 0
        %1260 = vmatprep.subr.bf16.mxu0 0
        %1261 = vmatpush1.bf16.msra.mxu0 0
        %1262 = vmatprep.mubr.bf16.mxu0 0
        %1263 = vmatmul.mubr.bf16.gmra.mrb[0].mxu0 %v1228
        %v1264 = vpop.f32.mrb[0].mxu0
        %v1265 = vadd.f32 0.0, %v1264
        %v1266 = vpop.f32.mrb[0].mxu0
        %v1267 = vpop.f32.mrb[0].mxu0
        %v1268 = vadd.f32 0.0, %v1267
        %v1269 = vpop.f32.mrb[0].mxu0
        %1270 = vdwg.mxu0
        %1271 = vrot.lane.b32.xlu0 %v585, 64
        %v1272 = vpop.permute.xlu0 %1271
        %v1275 = vsel %vm602, %v1171, 0
        %1277 = vmatprep.subr.bf16.mxu0 0
        %1278 = vmatpush1.bf16.msra.mxu0 %v1272
        %1279 = vmatprep.subr.bf16.mxu0 0
        %1280 = vmatpush1.bf16.msra.mxu0 0
        %1281 = vmatprep.subr.bf16.mxu0 0
        %1282 = vmatpush1.bf16.msra.mxu0 0
        %1283 = vmatprep.subr.bf16.mxu0 0
        %1284 = vmatpush1.bf16.msra.mxu0 0
        %1285 = vmatprep.subr.bf16.mxu0 0
        %1286 = vmatpush1.bf16.msra.mxu0 0
        %1287 = vmatprep.subr.bf16.mxu0 0
        %1288 = vmatpush1.bf16.msra.mxu0 0
        %1289 = vmatprep.subr.bf16.mxu0 0
        %1290 = vmatpush1.bf16.msra.mxu0 0
        %1291 = vmatprep.subr.bf16.mxu0 0
        %1292 = vmatpush1.bf16.msra.mxu0 0
        %1293 = vmatprep.subr.bf16.mxu0 0
        %1294 = vmatpush1.bf16.msra.mxu0 0
        %1295 = vmatprep.subr.bf16.mxu0 0
        %1296 = vmatpush1.bf16.msra.mxu0 0
        %1297 = vmatprep.subr.bf16.mxu0 0
        %1298 = vmatpush1.bf16.msra.mxu0 0
        %1299 = vmatprep.subr.bf16.mxu0 0
        %1300 = vmatpush1.bf16.msra.mxu0 0
        %1301 = vmatprep.subr.bf16.mxu0 0
        %1302 = vmatpush1.bf16.msra.mxu0 0
        %1303 = vmatprep.subr.bf16.mxu0 0
        %1304 = vmatpush1.bf16.msra.mxu0 0
        %1305 = vmatprep.subr.bf16.mxu0 0
        %1306 = vmatpush1.bf16.msra.mxu0 0
        %1307 = vmatprep.subr.bf16.mxu0 0
        %1308 = vmatpush1.bf16.msra.mxu0 0
        %1309 = vmatprep.mubr.bf16.mxu0 0
        %1310 = vmatmul.mubr.bf16.gmra.mrb[0].mxu0 %v1275
        %v1311 = vpop.f32.mrb[0].mxu0
        %v1312 = vadd.f32 0.0, %v1311
        %v1313 = vpop.f32.mrb[0].mxu0
        %v1314 = vpop.f32.mrb[0].mxu0
        %v1315 = vadd.f32 0.0, %v1314
        %v1316 = vpop.f32.mrb[0].mxu0
        %1317 = vdwg.mxu0
        %1318 = vrot.lane.b32.xlu0 %v593, 64
        %v1319 = vpop.permute.xlu0 %1318
        %v1322 = vsel %vm602, %v1172, 0
        %1324 = vmatprep.subr.bf16.mxu0 0
        %1325 = vmatpush1.bf16.msra.mxu0 %v1319
        %1326 = vmatprep.subr.bf16.mxu0 0
        %1327 = vmatpush1.bf16.msra.mxu0 0
        %1328 = vmatprep.subr.bf16.mxu0 0
        %1329 = vmatpush1.bf16.msra.mxu0 0
        %1330 = vmatprep.subr.bf16.mxu0 0
        %1331 = vmatpush1.bf16.msra.mxu0 0
        %1332 = vmatprep.subr.bf16.mxu0 0
        %1333 = vmatpush1.bf16.msra.mxu0 0
        %1334 = vmatprep.subr.bf16.mxu0 0
        %1335 = vmatpush1.bf16.msra.mxu0 0
        %1336 = vmatprep.subr.bf16.mxu0 0
        %1337 = vmatpush1.bf16.msra.mxu0 0
        %1338 = vmatprep.subr.bf16.mxu0 0
        %1339 = vmatpush1.bf16.msra.mxu0 0
        %1340 = vmatprep.subr.bf16.mxu0 0
        %1341 = vmatpush1.bf16.msra.mxu0 0
        %1342 = vmatprep.subr.bf16.mxu0 0
        %1343 = vmatpush1.bf16.msra.mxu0 0
        %1344 = vmatprep.subr.bf16.mxu0 0
        %1345 = vmatpush1.bf16.msra.mxu0 0
        %1346 = vmatprep.subr.bf16.mxu0 0
        %1347 = vmatpush1.bf16.msra.mxu0 0
        %1348 = vmatprep.subr.bf16.mxu0 0
        %1349 = vmatpush1.bf16.msra.mxu0 0
        %1350 = vmatprep.subr.bf16.mxu0 0
        %1351 = vmatpush1.bf16.msra.mxu0 0
        %1352 = vmatprep.subr.bf16.mxu0 0
        %1353 = vmatpush1.bf16.msra.mxu0 0
        %1354 = vmatprep.subr.bf16.mxu0 0
        %1355 = vmatpush1.bf16.msra.mxu0 0
        %1356 = vmatprep.mubr.bf16.mxu0 0
        %1357 = vmatmul.mubr.bf16.gmra.mrb[0].mxu0 %v1322
        %v1358 = vpop.f32.mrb[0].mxu0
        %v1359 = vadd.f32 0.0, %v1358
        %v1360 = vpop.f32.mrb[0].mxu0
        %v1361 = vpop.f32.mrb[0].mxu0
        %v1362 = vadd.f32 0.0, %v1361
        %v1363 = vpop.f32.mrb[0].mxu0
        %1364 = vdwg.mxu0
        %1365 = vrot.lane.b32.xlu0 %v586, 64
        %v1366 = vpop.permute.xlu0 %1365
        %v1369 = vsel %vm602, %v1173, 0
        %1371 = vmatprep.subr.bf16.mxu0 0
        %1372 = vmatpush1.bf16.msra.mxu0 %v1366
        %1373 = vmatprep.subr.bf16.mxu0 0
        %1374 = vmatpush1.bf16.msra.mxu0 0
        %1375 = vmatprep.subr.bf16.mxu0 0
        %1376 = vmatpush1.bf16.msra.mxu0 0
        %1377 = vmatprep.subr.bf16.mxu0 0
        %1378 = vmatpush1.bf16.msra.mxu0 0
        %1379 = vmatprep.subr.bf16.mxu0 0
        %1380 = vmatpush1.bf16.msra.mxu0 0
        %1381 = vmatprep.subr.bf16.mxu0 0
        %1382 = vmatpush1.bf16.msra.mxu0 0
        %1383 = vmatprep.subr.bf16.mxu0 0
        %1384 = vmatpush1.bf16.msra.mxu0 0
        %1385 = vmatprep.subr.bf16.mxu0 0
        %1386 = vmatpush1.bf16.msra.mxu0 0
        %1387 = vmatprep.subr.bf16.mxu0 0
        %1388 = vmatpush1.bf16.msra.mxu0 0
        %1389 = vmatprep.subr.bf16.mxu0 0
        %1390 = vmatpush1.bf16.msra.mxu0 0
        %1391 = vmatprep.subr.bf16.mxu0 0
        %1392 = vmatpush1.bf16.msra.mxu0 0
        %1393 = vmatprep.subr.bf16.mxu0 0
        %1394 = vmatpush1.bf16.msra.mxu0 0
        %1395 = vmatprep.subr.bf16.mxu0 0
        %1396 = vmatpush1.bf16.msra.mxu0 0
        %1397 = vmatprep.subr.bf16.mxu0 0
        %1398 = vmatpush1.bf16.msra.mxu0 0
        %1399 = vmatprep.subr.bf16.mxu0 0
        %1400 = vmatpush1.bf16.msra.mxu0 0
        %1401 = vmatprep.subr.bf16.mxu0 0
        %1402 = vmatpush1.bf16.msra.mxu0 0
        %1403 = vmatprep.mubr.bf16.mxu0 0
        %1404 = vmatmul.mubr.bf16.gmra.mrb[0].mxu0 %v1369
        %v1405 = vpop.f32.mrb[0].mxu0
        %v1406 = vadd.f32 0.0, %v1405
        %v1407 = vpop.f32.mrb[0].mxu0
        %v1408 = vpop.f32.mrb[0].mxu0
        %v1409 = vadd.f32 0.0, %v1408
        %v1410 = vpop.f32.mrb[0].mxu0
        %1411 = vdwg.mxu0
        %1412 = vrot.lane.b32.xlu0 %v596, 64
        %v1413 = vpop.permute.xlu0 %1412
        %v1416 = vsel %vm602, %v1174, 0
        %1418 = vmatprep.subr.bf16.mxu0 0
        %1419 = vmatpush1.bf16.msra.mxu0 %v1413
        %1420 = vmatprep.subr.bf16.mxu0 0
        %1421 = vmatpush1.bf16.msra.mxu0 0
        %1422 = vmatprep.subr.bf16.mxu0 0
        %1423 = vmatpush1.bf16.msra.mxu0 0
        %1424 = vmatprep.subr.bf16.mxu0 0
        %1425 = vmatpush1.bf16.msra.mxu0 0
        %1426 = vmatprep.subr.bf16.mxu0 0
        %1427 = vmatpush1.bf16.msra.mxu0 0
        %1428 = vmatprep.subr.bf16.mxu0 0
        %1429 = vmatpush1.bf16.msra.mxu0 0
        %1430 = vmatprep.subr.bf16.mxu0 0
        %1431 = vmatpush1.bf16.msra.mxu0 0
        %1432 = vmatprep.subr.bf16.mxu0 0
        %1433 = vmatpush1.bf16.msra.mxu0 0
        %1434 = vmatprep.subr.bf16.mxu0 0
        %1435 = vmatpush1.bf16.msra.mxu0 0
        %1436 = vmatprep.subr.bf16.mxu0 0
        %1437 = vmatpush1.bf16.msra.mxu0 0
        %1438 = vmatprep.subr.bf16.mxu0 0
        %1439 = vmatpush1.bf16.msra.mxu0 0
        %1440 = vmatprep.subr.bf16.mxu0 0
        %1441 = vmatpush1.bf16.msra.mxu0 0
        %1442 = vmatprep.subr.bf16.mxu0 0
        %1443 = vmatpush1.bf16.msra.mxu0 0
        %1444 = vmatprep.subr.bf16.mxu0 0
        %1445 = vmatpush1.bf16.msra.mxu0 0
        %1446 = vmatprep.subr.bf16.mxu0 0
        %1447 = vmatpush1.bf16.msra.mxu0 0
        %1448 = vmatprep.subr.bf16.mxu0 0
        %1449 = vmatpush1.bf16.msra.mxu0 0
        %1450 = vmatprep.mubr.bf16.mxu0 0
        %1451 = vmatmul.mubr.bf16.gmra.mrb[0].mxu0 %v1416
        %v1452 = vpop.f32.mrb[0].mxu0
        %v1453 = vadd.f32 0.0, %v1452
        %v1454 = vpop.f32.mrb[0].mxu0
        %v1455 = vpop.f32.mrb[0].mxu0
        %v1456 = vadd.f32 0.0, %v1455
        %v1457 = vpop.f32.mrb[0].mxu0
        %1458 = vdwg.mxu0
        %1459 = vrot.lane.b32.xlu0 %v587, 64
        %v1460 = vpop.permute.xlu0 %1459
        %v1463 = vsel %vm602, %v1175, 0
        %1465 = vmatprep.subr.bf16.mxu0 0
        %1466 = vmatpush1.bf16.msra.mxu0 %v1460
        %1467 = vmatprep.subr.bf16.mxu0 0
        %1468 = vmatpush1.bf16.msra.mxu0 0
        %1469 = vmatprep.subr.bf16.mxu0 0
        %1470 = vmatpush1.bf16.msra.mxu0 0
        %1471 = vmatprep.subr.bf16.mxu0 0
        %1472 = vmatpush1.bf16.msra.mxu0 0
        %1473 = vmatprep.subr.bf16.mxu0 0
        %1474 = vmatpush1.bf16.msra.mxu0 0
        %1475 = vmatprep.subr.bf16.mxu0 0
        %1476 = vmatpush1.bf16.msra.mxu0 0
        %1477 = vmatprep.subr.bf16.mxu0 0
        %1478 = vmatpush1.bf16.msra.mxu0 0
        %1479 = vmatprep.subr.bf16.mxu0 0
        %1480 = vmatpush1.bf16.msra.mxu0 0
        %1481 = vmatprep.subr.bf16.mxu0 0
        %1482 = vmatpush1.bf16.msra.mxu0 0
        %1483 = vmatprep.subr.bf16.mxu0 0
        %1484 = vmatpush1.bf16.msra.mxu0 0
        %1485 = vmatprep.subr.bf16.mxu0 0
        %1486 = vmatpush1.bf16.msra.mxu0 0
        %1487 = vmatprep.subr.bf16.mxu0 0
        %1488 = vmatpush1.bf16.msra.mxu0 0
        %1489 = vmatprep.subr.bf16.mxu0 0
        %1490 = vmatpush1.bf16.msra.mxu0 0
        %1491 = vmatprep.subr.bf16.mxu0 0
        %1492 = vmatpush1.bf16.msra.mxu0 0
        %1493 = vmatprep.subr.bf16.mxu0 0
        %1494 = vmatpush1.bf16.msra.mxu0 0
        %1495 = vmatprep.subr.bf16.mxu0 0
        %1496 = vmatpush1.bf16.msra.mxu0 0
        %1497 = vmatprep.mubr.bf16.mxu0 0
        %1498 = vmatmul.mubr.bf16.gmra.mrb[0].mxu0 %v1463
        %v1499 = vpop.f32.mrb[0].mxu0
        %v1500 = vadd.f32 0.0, %v1499
        %v1501 = vpop.f32.mrb[0].mxu0
        %v1502 = vpop.f32.mrb[0].mxu0
        %v1503 = vadd.f32 0.0, %v1502
        %v1504 = vpop.f32.mrb[0].mxu0
        %1505 = vdwg.mxu0
        %1506 = vrot.lane.b32.xlu0 %v599, 64
        %v1507 = vpop.permute.xlu0 %1506
        %v1510 = vsel %vm602, %v1176, 0
        %1512 = vmatprep.subr.bf16.mxu0 0
        %1513 = vmatpush1.bf16.msra.mxu0 %v1507
        %1514 = vmatprep.subr.bf16.mxu0 0
        %1515 = vmatpush1.bf16.msra.mxu0 0
        %1516 = vmatprep.subr.bf16.mxu0 0
        %1517 = vmatpush1.bf16.msra.mxu0 0
        %1518 = vmatprep.subr.bf16.mxu0 0
        %1519 = vmatpush1.bf16.msra.mxu0 0
        %1520 = vmatprep.subr.bf16.mxu0 0
        %1521 = vmatpush1.bf16.msra.mxu0 0
        %1522 = vmatprep.subr.bf16.mxu0 0
        %1523 = vmatpush1.bf16.msra.mxu0 0
        %1524 = vmatprep.subr.bf16.mxu0 0
        %1525 = vmatpush1.bf16.msra.mxu0 0
        %1526 = vmatprep.subr.bf16.mxu0 0
        %1527 = vmatpush1.bf16.msra.mxu0 0
        %1528 = vmatprep.subr.bf16.mxu0 0
        %1529 = vmatpush1.bf16.msra.mxu0 0
        %1530 = vmatprep.subr.bf16.mxu0 0
        %1531 = vmatpush1.bf16.msra.mxu0 0
        %1532 = vmatprep.subr.bf16.mxu0 0
        %1533 = vmatpush1.bf16.msra.mxu0 0
        %1534 = vmatprep.subr.bf16.mxu0 0
        %1535 = vmatpush1.bf16.msra.mxu0 0
        %1536 = vmatprep.subr.bf16.mxu0 0
        %1537 = vmatpush1.bf16.msra.mxu0 0
        %1538 = vmatprep.subr.bf16.mxu0 0
        %1539 = vmatpush1.bf16.msra.mxu0 0
        %1540 = vmatprep.subr.bf16.mxu0 0
        %1541 = vmatpush1.bf16.msra.mxu0 0
        %1542 = vmatprep.subr.bf16.mxu0 0
        %1543 = vmatpush1.bf16.msra.mxu0 0
        %1544 = vmatprep.mubr.bf16.mxu0 0
        %1545 = vmatmul.mubr.bf16.gmra.mrb[0].mxu0 %v1510
        %v1546 = vpop.f32.mrb[0].mxu0
        %v1547 = vadd.f32 0.0, %v1546
        %v1548 = vpop.f32.mrb[0].mxu0
        %v1549 = vpop.f32.mrb[0].mxu0
        %v1550 = vadd.f32 0.0, %v1549
        %v1551 = vpop.f32.mrb[0].mxu0
        %1552 = vdwg.mxu0
        %1555 = vrot.lane.b32.xlu0 %v1265, 16
        %v1556 = vpop.permute.xlu0 %1555
        %1557 = vrot.lane.b32.xlu0 %v1268, 16
        %v1558 = vpop.permute.xlu0 %1557
        %v1561 = vsel %vm602, %v1218, %v1556
        %v1562 = vsel %vm602, %v1221, %v1558
        %1565 = vrot.lane.b32.xlu0 %v1359, 16
        %v1566 = vpop.permute.xlu0 %1565
        %1567 = vrot.lane.b32.xlu0 %v1362, 16
        %v1568 = vpop.permute.xlu0 %1567
        %v1571 = vsel %vm602, %v1312, %v1566
        %v1572 = vsel %vm602, %v1315, %v1568
        %1575 = vrot.lane.b32.xlu0 %v1453, 16
        %v1576 = vpop.permute.xlu0 %1575
        %1577 = vrot.lane.b32.xlu0 %v1456, 16
        %v1578 = vpop.permute.xlu0 %1577
        %v1581 = vsel %vm602, %v1406, %v1576
        %v1582 = vsel %vm602, %v1409, %v1578
        %1585 = vrot.lane.b32.xlu0 %v1547, 16
        %v1586 = vpop.permute.xlu0 %1585
        %1587 = vrot.lane.b32.xlu0 %v1550, 16
        %v1588 = vpop.permute.xlu0 %1587
        %v1591 = vsel %vm602, %v1500, %v1586
        %v1592 = vsel %vm602, %v1503, %v1588
        %v1593 = vld [vmem:[%s421] sm:$0xf]
        %v1594 = vld [vmem:[%s421 + $0x4] sm:$0xf]
        %v1595 = vld [vmem:[%s421 + $0x8] sm:$0xf]
        %v1596 = vld [vmem:[%s421 + $0xc] sm:$0xf]
        %v1597 = vpack.c.bf16 %v1562, %v1561
        %v1598 = vpack.c.bf16 %v1572, %v1571
        %v1599 = vpack.c.bf16 %v1582, %v1581
        %v1600 = vpack.c.bf16 %v1592, %v1591
        %v1601 = vlaneseq
        %v1602 = vshrl.u32 %v1601, 7
        %v1603 = vsub.s32 0, %v1602
        %v1604 = vrot.slane %v473, %v1603
        %v1609 = vunpack.c.l.b16 %v1593
        %v1610 = vunpack.c.l.b16 %v1594
        %v1611 = vunpack.c.l.b16 %v1595
        %v1612 = vunpack.c.l.b16 %v1596
        %v1613 = vpack.c.b16 %v1610, %v1609
        %v1614 = vpack.c.b16 %v1612, %v1611
        %v1618 = vsel %vm506, %v1597, 0
        %v1621 = vsel %vm506, %v1598, 0
        %v1624 = vsel %vm506, %v1599, 0
        %v1627 = vsel %vm506, %v1600, 0
        %1629 = vmatprep.subr.bf16.mxu0 0
        %1630 = vmatpush1.bf16.msra.mxu0 %v1613
        %1631 = vmatprep.subr.bf16.mxu0 0
        %1632 = vmatpush1.bf16.msra.mxu0 %v1614
        %1633 = vmatprep.subr.bf16.mxu0 0
        %1634 = vmatpush1.bf16.msra.mxu0 0
        %1635 = vmatprep.subr.bf16.mxu0 0
        %1636 = vmatpush1.bf16.msra.mxu0 0
        %1637 = vmatprep.subr.bf16.mxu0 0
        %1638 = vmatpush1.bf16.msra.mxu0 0
        %1639 = vmatprep.subr.bf16.mxu0 0
        %1640 = vmatpush1.bf16.msra.mxu0 0
        %1641 = vmatprep.subr.bf16.mxu0 0
        %1642 = vmatpush1.bf16.msra.mxu0 0
        %1643 = vmatprep.subr.bf16.mxu0 0
        %1644 = vmatpush1.bf16.msra.mxu0 0
        %1645 = vmatprep.subr.bf16.mxu0 0
        %1646 = vmatpush1.bf16.msra.mxu0 0
        %1647 = vmatprep.subr.bf16.mxu0 0
        %1648 = vmatpush1.bf16.msra.mxu0 0
        %1649 = vmatprep.subr.bf16.mxu0 0
        %1650 = vmatpush1.bf16.msra.mxu0 0
        %1651 = vmatprep.subr.bf16.mxu0 0
        %1652 = vmatpush1.bf16.msra.mxu0 0
        %1653 = vmatprep.subr.bf16.mxu0 0
        %1654 = vmatpush1.bf16.msra.mxu0 0
        %1655 = vmatprep.subr.bf16.mxu0 0
        %1656 = vmatpush1.bf16.msra.mxu0 0
        %1657 = vmatprep.subr.bf16.mxu0 0
        %1658 = vmatpush1.bf16.msra.mxu0 0
        %1659 = vmatprep.subr.bf16.mxu0 0
        %1660 = vmatpush1.bf16.msra.mxu0 0
        %1661 = vmatprep.mubr.bf16.mxu0 0
        %1662 = vmatmul.mubr.bf16.gmra.mrb[0].mxu0 %v1618
        %v1663 = vpop.f32.mrb[0].mxu0
        %v1664 = vadd.f32 %v1604, %v1663
        %v1665 = vpop.f32.mrb[0].mxu0
        %v1666 = vpop.f32.mrb[0].mxu0
        %v1667 = vadd.f32 %v1604, %v1666
        %v1668 = vpop.f32.mrb[0].mxu0
        %1669 = vmatprep.mubr.bf16.mxu0 0
        %1670 = vmatmul.mubr.bf16.gmra.mrb[0].mxu0 %v1621
        %v1671 = vpop.f32.mrb[0].mxu0
        %v1672 = vadd.f32 %v1604, %v1671
        %v1673 = vpop.f32.mrb[0].mxu0
        %v1674 = vpop.f32.mrb[0].mxu0
        %v1675 = vadd.f32 %v1604, %v1674
        %v1676 = vpop.f32.mrb[0].mxu0
        %1677 = vmatprep.mubr.bf16.mxu0 0
        %1678 = vmatmul.mubr.bf16.gmra.mrb[0].mxu0 %v1624
        %v1679 = vpop.f32.mrb[0].mxu0
        %v1680 = vadd.f32 %v1604, %v1679
        %v1681 = vpop.f32.mrb[0].mxu0
        %v1682 = vpop.f32.mrb[0].mxu0
        %v1683 = vadd.f32 %v1604, %v1682
        %v1684 = vpop.f32.mrb[0].mxu0
        %1685 = vmatprep.mubr.bf16.mxu0 0
        %1686 = vmatmul.mubr.bf16.gmra.mrb[0].mxu0 %v1627
        %v1687 = vpop.f32.mrb[0].mxu0
        %v1688 = vadd.f32 %v1604, %v1687
        %v1689 = vpop.f32.mrb[0].mxu0
        %v1690 = vpop.f32.mrb[0].mxu0
        %v1691 = vadd.f32 %v1604, %v1690
        %v1692 = vpop.f32.mrb[0].mxu0
        %1693 = vdwg.mxu0
        %v1694 = vadd.f32 %v465, %v1664
        %v1695 = vadd.f32 %v466, %v1667
        %v1696 = vadd.f32 %v467, %v1672
        %v1697 = vadd.f32 %v468, %v1675
        %v1698 = vadd.f32 %v469, %v1680
        %v1699 = vadd.f32 %v470, %v1683
        %v1700 = vadd.f32 %v471, %v1688
        %v1701 = vadd.f32 %v472, %v1691
        %v1702 = vsel %vm506, %v1694, 0.0
        %1703 = vadd.xlane.f32.xlu0 %v1702
        %v1704 = vpop.xlane.xlu0 %1703
        %v1705 = vsel %vm506, %v1695, 0.0
        %1706 = vadd.xlane.f32.xlu0 %v1705
        %v1707 = vpop.xlane.xlu0 %1706
        %v1708 = vsel %vm506, %v1696, 0.0
        %1709 = vadd.xlane.f32.xlu0 %v1708
        %v1710 = vpop.xlane.xlu0 %1709
        %v1711 = vsel %vm506, %v1697, 0.0
        %1712 = vadd.xlane.f32.xlu0 %v1711
        %v1713 = vpop.xlane.xlu0 %1712
        %v1714 = vsel %vm506, %v1698, 0.0
        %1715 = vadd.xlane.f32.xlu0 %v1714
        %v1716 = vpop.xlane.xlu0 %1715
        %v1717 = vsel %vm506, %v1699, 0.0
        %1718 = vadd.xlane.f32.xlu0 %v1717
        %v1719 = vpop.xlane.xlu0 %1718
        %v1720 = vsel %vm506, %v1700, 0.0
        %1721 = vadd.xlane.f32.xlu0 %v1720
        %v1722 = vpop.xlane.xlu0 %1721
        %v1723 = vsel %vm506, %v1701, 0.0
        %1724 = vadd.xlane.f32.xlu0 %v1723
        %v1725 = vpop.xlane.xlu0 %1724
        %v1726 = vrcp.pop 32.0
        %v1727 = vmul.f32 %v1704, %v1726
        %v1728 = vmul.f32 %v1707, %v1726
        %v1729 = vmul.f32 %v1710, %v1726
        %v1730 = vmul.f32 %v1713, %v1726
        %v1731 = vmul.f32 %v1716, %v1726
        %v1732 = vmul.f32 %v1719, %v1726
        %v1733 = vmul.f32 %v1722, %v1726
        %v1734 = vmul.f32 %v1725, %v1726
        %v1735 = vsub.f32 %v1694, %v1727
        %v1736 = vsub.f32 %v1695, %v1728
        %v1737 = vsub.f32 %v1696, %v1729
        %v1738 = vsub.f32 %v1697, %v1730
        %v1739 = vsub.f32 %v1698, %v1731
        %v1740 = vsub.f32 %v1699, %v1732
        %v1741 = vsub.f32 %v1700, %v1733
        %v1742 = vsub.f32 %v1701, %v1734
        %v1743 = vmul.f32 %v1735, %v1735
        %v1744 = vmul.f32 %v1736, %v1736
        %v1745 = vmul.f32 %v1737, %v1737
        %v1746 = vmul.f32 %v1738, %v1738
        %v1747 = vmul.f32 %v1739, %v1739
        %v1748 = vmul.f32 %v1740, %v1740
        %v1749 = vmul.f32 %v1741, %v1741
        %v1750 = vmul.f32 %v1742, %v1742
        %v1751 = vsel %vm506, %v1743, 0.0
        %1752 = vadd.xlane.f32.xlu0 %v1751
        %v1753 = vpop.xlane.xlu0 %1752
        %v1754 = vsel %vm506, %v1744, 0.0
        %1755 = vadd.xlane.f32.xlu0 %v1754
        %v1756 = vpop.xlane.xlu0 %1755
        %v1757 = vsel %vm506, %v1745, 0.0
        %1758 = vadd.xlane.f32.xlu0 %v1757
        %v1759 = vpop.xlane.xlu0 %1758
        %v1760 = vsel %vm506, %v1746, 0.0
        %1761 = vadd.xlane.f32.xlu0 %v1760
        %v1762 = vpop.xlane.xlu0 %1761
        %v1763 = vsel %vm506, %v1747, 0.0
        %1764 = vadd.xlane.f32.xlu0 %v1763
        %v1765 = vpop.xlane.xlu0 %1764
        %v1766 = vsel %vm506, %v1748, 0.0
        %1767 = vadd.xlane.f32.xlu0 %v1766
        %v1768 = vpop.xlane.xlu0 %1767
        %v1769 = vsel %vm506, %v1749, 0.0
        %1770 = vadd.xlane.f32.xlu0 %v1769
        %v1771 = vpop.xlane.xlu0 %1770
        %v1772 = vsel %vm506, %v1750, 0.0
        %1773 = vadd.xlane.f32.xlu0 %v1772
        %v1774 = vpop.xlane.xlu0 %1773
        %v1775 = vmul.f32 %v1753, %v1726
        %v1776 = vmul.f32 %v1756, %v1726
        %v1777 = vmul.f32 %v1759, %v1726
        %v1778 = vmul.f32 %v1762, %v1726
        %v1779 = vmul.f32 %v1765, %v1726
        %v1780 = vmul.f32 %v1768, %v1726
        %v1781 = vmul.f32 %v1771, %v1726
        %v1782 = vmul.f32 %v1774, %v1726
        %v1783 = vadd.f32 %v1775, 1e-12
        %v1784 = vadd.f32 %v1776, 1e-12
        %v1785 = vadd.f32 %v1777, 1e-12
        %v1786 = vadd.f32 %v1778, 1e-12
        %v1787 = vadd.f32 %v1779, 1e-12
        %v1788 = vadd.f32 %v1780, 1e-12
        %v1789 = vadd.f32 %v1781, 1e-12
        %v1790 = vadd.f32 %v1782, 1e-12
        %v1791 = vrsqrt.pop %v1783
        %v1792 = vrsqrt.pop %v1784
        %v1793 = vrsqrt.pop %v1785
        %v1794 = vrsqrt.pop %v1786
        %v1795 = vrsqrt.pop %v1787
        %v1796 = vrsqrt.pop %v1788
        %v1797 = vrsqrt.pop %v1789
        %v1798 = vrsqrt.pop %v1790
        %v1799 = vmul.f32 %v1735, %v1791
        %v1800 = vmul.f32 %v1736, %v1792
        %v1801 = vmul.f32 %v1737, %v1793
        %v1802 = vmul.f32 %v1738, %v1794
        %v1803 = vmul.f32 %v1739, %v1795
        %v1804 = vmul.f32 %v1740, %v1796
        %v1805 = vmul.f32 %v1741, %v1797
        %v1806 = vmul.f32 %v1742, %v1798
        %v1807 = vlaneseq
        %v1808 = vshrl.u32 %v1807, 7
        %v1809 = vsub.s32 0, %v1808
        %v1810 = vrot.slane %v475, %v1809
        %v1811 = vmul.f32 %v1799, %v1810
        %v1812 = vmul.f32 %v1800, %v1810
        %v1813 = vmul.f32 %v1801, %v1810
        %v1814 = vmul.f32 %v1802, %v1810
        %v1815 = vmul.f32 %v1803, %v1810
        %v1816 = vmul.f32 %v1804, %v1810
        %v1817 = vmul.f32 %v1805, %v1810
        %v1818 = vmul.f32 %v1806, %v1810
        %v1819 = vlaneseq
        %v1820 = vshrl.u32 %v1819, 7
        %v1821 = vsub.s32 0, %v1820
        %v1822 = vrot.slane %v476, %v1821
        %v1823 = vadd.f32 %v1811, %v1822
        %v1824 = vadd.f32 %v1812, %v1822
        %v1825 = vadd.f32 %v1813, %v1822
        %v1826 = vadd.f32 %v1814, %v1822
        %v1827 = vadd.f32 %v1815, %v1822
        %v1828 = vadd.f32 %v1816, %v1822
        %v1829 = vadd.f32 %v1817, %v1822
        %v1830 = vadd.f32 %v1818, %v1822
        %v1831 = vld [vmem:[%s426] sm:$0xf]
        %v1832 = vld [vmem:[%s426 + $0x4] sm:$0xf]
        %v1833 = vld [vmem:[%s426 + $0x8] sm:$0xf]
        %v1834 = vld [vmem:[%s426 + $0xc] sm:$0xf]
        %v1835 = vpack.c.bf16 %v1824, %v1823
        %v1836 = vpack.c.bf16 %v1826, %v1825
        %v1837 = vpack.c.bf16 %v1828, %v1827
        %v1838 = vpack.c.bf16 %v1830, %v1829
        %v1839 = vld [vmem:[%s429] sm:$0x1]
        %v1841 = vlaneseq
        %v1842 = vshrl.u32 %v1841, 7
        %v1843 = vsub.s32 0, %v1842
        %v1844 = vrot.slane %v1839, %v1843
        %v1850 = vunpack.c.l.b16 %v1831
        %v1851 = vunpack.c.l.b16 %v1832
        %v1852 = vunpack.c.l.b16 %v1833
        %v1853 = vunpack.c.l.b16 %v1834
        %v1854 = vpack.c.b16 %v1851, %v1850
        %v1855 = vpack.c.b16 %v1853, %v1852
        %v1859 = vsel %vm506, %v1835, 0
        %v1862 = vsel %vm506, %v1836, 0
        %v1865 = vsel %vm506, %v1837, 0
        %v1868 = vsel %vm506, %v1838, 0
        %1870 = vmatprep.subr.bf16.mxu0 0
        %1871 = vmatpush1.bf16.msra.mxu0 %v1854
        %1872 = vmatprep.subr.bf16.mxu0 0
        %1873 = vmatpush1.bf16.msra.mxu0 %v1855
        %1874 = vmatprep.subr.bf16.mxu0 0
        %1875 = vmatpush1.bf16.msra.mxu0 0
        %1876 = vmatprep.subr.bf16.mxu0 0
        %1877 = vmatpush1.bf16.msra.mxu0 0
        %1878 = vmatprep.subr.bf16.mxu0 0
        %1879 = vmatpush1.bf16.msra.mxu0 0
        %1880 = vmatprep.subr.bf16.mxu0 0
        %1881 = vmatpush1.bf16.msra.mxu0 0
        %1882 = vmatprep.subr.bf16.mxu0 0
        %1883 = vmatpush1.bf16.msra.mxu0 0
        %1884 = vmatprep.subr.bf16.mxu0 0
        %1885 = vmatpush1.bf16.msra.mxu0 0
        %1886 = vmatprep.subr.bf16.mxu0 0
        %1887 = vmatpush1.bf16.msra.mxu0 0
        %1888 = vmatprep.subr.bf16.mxu0 0
        %1889 = vmatpush1.bf16.msra.mxu0 0
        %1890 = vmatprep.subr.bf16.mxu0 0
        %1891 = vmatpush1.bf16.msra.mxu0 0
        %1892 = vmatprep.subr.bf16.mxu0 0
        %1893 = vmatpush1.bf16.msra.mxu0 0
        %1894 = vmatprep.subr.bf16.mxu0 0
        %1895 = vmatpush1.bf16.msra.mxu0 0
        %1896 = vmatprep.subr.bf16.mxu0 0
        %1897 = vmatpush1.bf16.msra.mxu0 0
        %1898 = vmatprep.subr.bf16.mxu0 0
        %1899 = vmatpush1.bf16.msra.mxu0 0
        %1900 = vmatprep.subr.bf16.mxu0 0
        %1901 = vmatpush1.bf16.msra.mxu0 0
        %1902 = vmatprep.mubr.bf16.mxu0 0
        %1903 = vmatmul.mubr.bf16.gmra.mrb[0].mxu0 %v1859
        %v1904 = vpop.f32.mrb[0].mxu0
        %v1905 = vadd.f32 %v1844, %v1904
        %v1906 = vpop.f32.mrb[0].mxu0
        %v1907 = vpop.f32.mrb[0].mxu0
        %v1908 = vadd.f32 %v1844, %v1907
        %v1909 = vpop.f32.mrb[0].mxu0
        %1910 = vmatprep.mubr.bf16.mxu0 0
        %1911 = vmatmul.mubr.bf16.gmra.mrb[0].mxu0 %v1862
        %v1912 = vpop.f32.mrb[0].mxu0
        %v1913 = vadd.f32 %v1844, %v1912
        %v1914 = vpop.f32.mrb[0].mxu0
        %v1915 = vpop.f32.mrb[0].mxu0
        %v1916 = vadd.f32 %v1844, %v1915
        %v1917 = vpop.f32.mrb[0].mxu0
        %1918 = vmatprep.mubr.bf16.mxu0 0
        %1919 = vmatmul.mubr.bf16.gmra.mrb[0].mxu0 %v1865
        %v1920 = vpop.f32.mrb[0].mxu0
        %v1921 = vadd.f32 %v1844, %v1920
        %v1922 = vpop.f32.mrb[0].mxu0
        %v1923 = vpop.f32.mrb[0].mxu0
        %v1924 = vadd.f32 %v1844, %v1923
        %v1925 = vpop.f32.mrb[0].mxu0
        %1926 = vmatprep.mubr.bf16.mxu0 0
        %1927 = vmatmul.mubr.bf16.gmra.mrb[0].mxu0 %v1868
        %v1928 = vpop.f32.mrb[0].mxu0
        %v1929 = vadd.f32 %v1844, %v1928
        %v1930 = vpop.f32.mrb[0].mxu0
        %v1931 = vpop.f32.mrb[0].mxu0
        %v1932 = vadd.f32 %v1844, %v1931
        %v1933 = vpop.f32.mrb[0].mxu0
        %1934 = vdwg.mxu0
        %v1935 = vmul.f32 %v1905, %v1905
        %v1936 = vmul.f32 %v1908, %v1908
        %v1937 = vmul.f32 %v1913, %v1913
        %v1938 = vmul.f32 %v1916, %v1916
        %v1939 = vmul.f32 %v1921, %v1921
        %v1940 = vmul.f32 %v1924, %v1924
        %v1941 = vmul.f32 %v1929, %v1929
        %v1942 = vmul.f32 %v1932, %v1932
        %v1943 = vmul.f32 %v1905, %v1935
        %v1944 = vmul.f32 %v1908, %v1936
        %v1945 = vmul.f32 %v1913, %v1937
        %v1946 = vmul.f32 %v1916, %v1938
        %v1947 = vmul.f32 %v1921, %v1939
        %v1948 = vmul.f32 %v1924, %v1940
        %v1949 = vmul.f32 %v1929, %v1941
        %v1950 = vmul.f32 %v1932, %v1942
        %v1951 = vmul.f32 %v1943, 0.044715
        %v1952 = vmul.f32 %v1944, 0.044715
        %v1953 = vmul.f32 %v1945, 0.044715
        %v1954 = vmul.f32 %v1946, 0.044715
        %v1955 = vmul.f32 %v1947, 0.044715
        %v1956 = vmul.f32 %v1948, 0.044715
        %v1957 = vmul.f32 %v1949, 0.044715
        %v1958 = vmul.f32 %v1950, 0.044715
        %v1959 = vadd.f32 %v1905, %v1951
        %v1960 = vadd.f32 %v1908, %v1952
        %v1961 = vadd.f32 %v1913, %v1953
        %v1962 = vadd.f32 %v1916, %v1954
        %v1963 = vadd.f32 %v1921, %v1955
        %v1964 = vadd.f32 %v1924, %v1956
        %v1965 = vadd.f32 %v1929, %v1957
        %v1966 = vadd.f32 %v1932, %v1958
        %v1967 = vmul.f32 %v1959, 0.7978846
        %v1968 = vmul.f32 %v1960, 0.7978846
        %v1969 = vmul.f32 %v1961, 0.7978846
        %v1970 = vmul.f32 %v1962, 0.7978846
        %v1971 = vmul.f32 %v1963, 0.7978846
        %v1972 = vmul.f32 %v1964, 0.7978846
        %v1973 = vmul.f32 %v1965, 0.7978846
        %v1974 = vmul.f32 %v1966, 0.7978846
        %v1975 = vtanh.pop %v1967
        %v1976 = vtanh.pop %v1968
        %v1977 = vtanh.pop %v1969
        %v1978 = vtanh.pop %v1970
        %v1979 = vtanh.pop %v1971
        %v1980 = vtanh.pop %v1972
        %v1981 = vtanh.pop %v1973
        %v1982 = vtanh.pop %v1974
        %v1983 = vadd.f32 %v1975, 1.0
        %v1984 = vadd.f32 %v1976, 1.0
        %v1985 = vadd.f32 %v1977, 1.0
        %v1986 = vadd.f32 %v1978, 1.0
        %v1987 = vadd.f32 %v1979, 1.0
        %v1988 = vadd.f32 %v1980, 1.0
        %v1989 = vadd.f32 %v1981, 1.0
        %v1990 = vadd.f32 %v1982, 1.0
        %v1991 = vmul.f32 %v1983, 0.5
        %v1992 = vmul.f32 %v1984, 0.5
        %v1993 = vmul.f32 %v1985, 0.5
        %v1994 = vmul.f32 %v1986, 0.5
        %v1995 = vmul.f32 %v1987, 0.5
        %v1996 = vmul.f32 %v1988, 0.5
        %v1997 = vmul.f32 %v1989, 0.5
        %v1998 = vmul.f32 %v1990, 0.5
        %v1999 = vmul.f32 %v1905, %v1991
        %v2000 = vmul.f32 %v1908, %v1992
        %v2001 = vmul.f32 %v1913, %v1993
        %v2002 = vmul.f32 %v1916, %v1994
        %v2003 = vmul.f32 %v1921, %v1995
        %v2004 = vmul.f32 %v1924, %v1996
        %v2005 = vmul.f32 %v1929, %v1997
        %v2006 = vmul.f32 %v1932, %v1998
        %v2007 = vld [vmem:[%s434] sm:$0xf]
        %v2008 = vld [vmem:[%s434 + $0x4] sm:$0xf]
        %v2009 = vld [vmem:[%s434 + $0x8] sm:$0xf]
        %v2010 = vld [vmem:[%s434 + $0xc] sm:$0xf]
        %v2011 = vld [vmem:[%s434 + $0x10] sm:$0xf]
        %v2012 = vld [vmem:[%s434 + $0x14] sm:$0xf]
        %v2013 = vld [vmem:[%s434 + $0x18] sm:$0xf]
        %v2014 = vld [vmem:[%s434 + $0x1c] sm:$0xf]
        %v2015 = vld [vmem:[%s434 + $0x20] sm:$0xf]
        %v2016 = vld [vmem:[%s434 + $0x24] sm:$0xf]
        %v2017 = vld [vmem:[%s434 + $0x28] sm:$0xf]
        %v2018 = vld [vmem:[%s434 + $0x2c] sm:$0xf]
        %v2019 = vld [vmem:[%s434 + $0x30] sm:$0xf]
        %v2020 = vld [vmem:[%s434 + $0x34] sm:$0xf]
        %v2021 = vld [vmem:[%s434 + $0x38] sm:$0xf]
        %v2022 = vld [vmem:[%s434 + $0x3c] sm:$0xf]
        %v2023 = vpack.c.bf16 %v2000, %v1999
        %v2024 = vpack.c.bf16 %v2002, %v2001
        %v2025 = vpack.c.bf16 %v2004, %v2003
        %v2026 = vpack.c.bf16 %v2006, %v2005
        %v2027 = vlaneseq
        %v2028 = vshrl.u32 %v2027, 7
        %v2029 = vsub.s32 0, %v2028
        %v2030 = vrot.slane %v474, %v2029
        %v2047 = vunpack.c.l.b16 %v2007
        %v2048 = vunpack.c.l.b16 %v2008
        %v2049 = vunpack.c.l.b16 %v2009
        %v2050 = vunpack.c.l.b16 %v2010
        %v2051 = vunpack.c.l.b16 %v2011
        %v2052 = vunpack.c.l.b16 %v2012
        %v2053 = vunpack.c.l.b16 %v2013
        %v2054 = vunpack.c.l.b16 %v2014
        %v2055 = vunpack.c.l.b16 %v2015
        %v2056 = vunpack.c.l.b16 %v2016
        %v2057 = vunpack.c.l.b16 %v2017
        %v2058 = vunpack.c.l.b16 %v2018
        %v2059 = vunpack.c.l.b16 %v2019
        %v2060 = vunpack.c.l.b16 %v2020
        %v2061 = vunpack.c.l.b16 %v2021
        %v2062 = vunpack.c.l.b16 %v2022
        %v2063 = vpack.c.b16 %v2048, %v2047
        %v2064 = vpack.c.b16 %v2050, %v2049
        %v2065 = vpack.c.b16 %v2052, %v2051
        %v2066 = vpack.c.b16 %v2054, %v2053
        %v2067 = vpack.c.b16 %v2056, %v2055
        %v2068 = vpack.c.b16 %v2058, %v2057
        %v2069 = vpack.c.b16 %v2060, %v2059
        %v2070 = vpack.c.b16 %v2062, %v2061
        %2079 = vmatprep.subr.bf16.mxu0 0
        %2080 = vmatpush1.bf16.msra.mxu0 %v2063
        %2081 = vmatprep.subr.bf16.mxu0 0
        %2082 = vmatpush1.bf16.msra.mxu0 %v2064
        %2083 = vmatprep.subr.bf16.mxu0 0
        %2084 = vmatpush1.bf16.msra.mxu0 %v2065
        %2085 = vmatprep.subr.bf16.mxu0 0
        %2086 = vmatpush1.bf16.msra.mxu0 %v2066
        %2087 = vmatprep.subr.bf16.mxu0 0
        %2088 = vmatpush1.bf16.msra.mxu0 %v2067
        %2089 = vmatprep.subr.bf16.mxu0 0
        %2090 = vmatpush1.bf16.msra.mxu0 %v2068
        %2091 = vmatprep.subr.bf16.mxu0 0
        %2092 = vmatpush1.bf16.msra.mxu0 %v2069
        %2093 = vmatprep.subr.bf16.mxu0 0
        %2094 = vmatpush1.bf16.msra.mxu0 %v2070
        %2095 = vmatprep.subr.bf16.mxu0 0
        %2096 = vmatpush1.bf16.msra.mxu0 0
        %2097 = vmatprep.subr.bf16.mxu0 0
        %2098 = vmatpush1.bf16.msra.mxu0 0
        %2099 = vmatprep.subr.bf16.mxu0 0
        %2100 = vmatpush1.bf16.msra.mxu0 0
        %2101 = vmatprep.subr.bf16.mxu0 0
        %2102 = vmatpush1.bf16.msra.mxu0 0
        %2103 = vmatprep.subr.bf16.mxu0 0
        %2104 = vmatpush1.bf16.msra.mxu0 0
        %2105 = vmatprep.subr.bf16.mxu0 0
        %2106 = vmatpush1.bf16.msra.mxu0 0
        %2107 = vmatprep.subr.bf16.mxu0 0
        %2108 = vmatpush1.bf16.msra.mxu0 0
        %2109 = vmatprep.subr.bf16.mxu0 0
        %2110 = vmatpush1.bf16.msra.mxu0 0
        %2111 = vmatprep.mubr.bf16.mxu0 0
        %2112 = vmatmul.mubr.bf16.gmra.mrb[0].mxu0 %v2023
        %v2113 = vpop.f32.mrb[0].mxu0
        %v2114 = vadd.f32 %v2030, %v2113
        %v2115 = vpop.f32.mrb[0].mxu0
        %v2116 = vpop.f32.mrb[0].mxu0
        %v2117 = vadd.f32 %v2030, %v2116
        %v2118 = vpop.f32.mrb[0].mxu0
        %2119 = vmatprep.mubr.bf16.mxu0 0
        %2120 = vmatmul.mubr.bf16.gmra.mrb[0].mxu0 %v2024
        %v2121 = vpop.f32.mrb[0].mxu0
        %v2122 = vadd.f32 %v2030, %v2121
        %v2123 = vpop.f32.mrb[0].mxu0
        %v2124 = vpop.f32.mrb[0].mxu0
        %v2125 = vadd.f32 %v2030, %v2124
        %v2126 = vpop.f32.mrb[0].mxu0
        %2127 = vmatprep.mubr.bf16.mxu0 0
        %2128 = vmatmul.mubr.bf16.gmra.mrb[0].mxu0 %v2025
        %v2129 = vpop.f32.mrb[0].mxu0
        %v2130 = vadd.f32 %v2030, %v2129
        %v2131 = vpop.f32.mrb[0].mxu0
        %v2132 = vpop.f32.mrb[0].mxu0
        %v2133 = vadd.f32 %v2030, %v2132
        %v2134 = vpop.f32.mrb[0].mxu0
        %2135 = vmatprep.mubr.bf16.mxu0 0
        %2136 = vmatmul.mubr.bf16.gmra.mrb[0].mxu0 %v2026
        %v2137 = vpop.f32.mrb[0].mxu0
        %v2138 = vadd.f32 %v2030, %v2137
        %v2139 = vpop.f32.mrb[0].mxu0
        %v2140 = vpop.f32.mrb[0].mxu0
        %v2141 = vadd.f32 %v2030, %v2140
        %v2142 = vpop.f32.mrb[0].mxu0
        %2143 = vdwg.mxu0
        %v2144 = vadd.f32 %v1823, %v2114
        %v2145 = vadd.f32 %v1824, %v2117
        %v2146 = vadd.f32 %v1825, %v2122
        %v2147 = vadd.f32 %v1826, %v2125
        %v2148 = vadd.f32 %v1827, %v2130
        %v2149 = vadd.f32 %v1828, %v2133
        %v2150 = vadd.f32 %v1829, %v2138
        %v2151 = vadd.f32 %v1830, %v2141
        %v2152 = vsel %vm506, %v2144, 0.0
        %2153 = vadd.xlane.f32.xlu0 %v2152
        %v2154 = vpop.xlane.xlu0 %2153
        %v2155 = vsel %vm506, %v2145, 0.0
        %2156 = vadd.xlane.f32.xlu0 %v2155
        %v2157 = vpop.xlane.xlu0 %2156
        %v2158 = vsel %vm506, %v2146, 0.0
        %2159 = vadd.xlane.f32.xlu0 %v2158
        %v2160 = vpop.xlane.xlu0 %2159
        %v2161 = vsel %vm506, %v2147, 0.0
        %2162 = vadd.xlane.f32.xlu0 %v2161
        %v2163 = vpop.xlane.xlu0 %2162
        %v2164 = vsel %vm506, %v2148, 0.0
        %2165 = vadd.xlane.f32.xlu0 %v2164
        %v2166 = vpop.xlane.xlu0 %2165
        %v2167 = vsel %vm506, %v2149, 0.0
        %2168 = vadd.xlane.f32.xlu0 %v2167
        %v2169 = vpop.xlane.xlu0 %2168
        %v2170 = vsel %vm506, %v2150, 0.0
        %2171 = vadd.xlane.f32.xlu0 %v2170
        %v2172 = vpop.xlane.xlu0 %2171
        %v2173 = vsel %vm506, %v2151, 0.0
        %2174 = vadd.xlane.f32.xlu0 %v2173
        %v2175 = vpop.xlane.xlu0 %2174
        %v2176 = vmul.f32 %v2154, %v1726
        %v2177 = vmul.f32 %v2157, %v1726
        %v2178 = vmul.f32 %v2160, %v1726
        %v2179 = vmul.f32 %v2163, %v1726
        %v2180 = vmul.f32 %v2166, %v1726
        %v2181 = vmul.f32 %v2169, %v1726
        %v2182 = vmul.f32 %v2172, %v1726
        %v2183 = vmul.f32 %v2175, %v1726
        %v2184 = vsub.f32 %v2144, %v2176
        %v2185 = vsub.f32 %v2145, %v2177
        %v2186 = vsub.f32 %v2146, %v2178
        %v2187 = vsub.f32 %v2147, %v2179
        %v2188 = vsub.f32 %v2148, %v2180
        %v2189 = vsub.f32 %v2149, %v2181
        %v2190 = vsub.f32 %v2150, %v2182
        %v2191 = vsub.f32 %v2151, %v2183
        %v2192 = vmul.f32 %v2184, %v2184
        %v2193 = vmul.f32 %v2185, %v2185
        %v2194 = vmul.f32 %v2186, %v2186
        %v2195 = vmul.f32 %v2187, %v2187
        %v2196 = vmul.f32 %v2188, %v2188
        %v2197 = vmul.f32 %v2189, %v2189
        %v2198 = vmul.f32 %v2190, %v2190
        %v2199 = vmul.f32 %v2191, %v2191
        %v2200 = vsel %vm506, %v2192, 0.0
        %2201 = vadd.xlane.f32.xlu0 %v2200
        %v2202 = vpop.xlane.xlu0 %2201
        %v2203 = vsel %vm506, %v2193, 0.0
        %2204 = vadd.xlane.f32.xlu0 %v2203
        %v2205 = vpop.xlane.xlu0 %2204
        %v2206 = vsel %vm506, %v2194, 0.0
        %2207 = vadd.xlane.f32.xlu0 %v2206
        %v2208 = vpop.xlane.xlu0 %2207
        %v2209 = vsel %vm506, %v2195, 0.0
        %2210 = vadd.xlane.f32.xlu0 %v2209
        %v2211 = vpop.xlane.xlu0 %2210
        %v2212 = vsel %vm506, %v2196, 0.0
        %2213 = vadd.xlane.f32.xlu0 %v2212
        %v2214 = vpop.xlane.xlu0 %2213
        %v2215 = vsel %vm506, %v2197, 0.0
        %2216 = vadd.xlane.f32.xlu0 %v2215
        %v2217 = vpop.xlane.xlu0 %2216
        %v2218 = vsel %vm506, %v2198, 0.0
        %2219 = vadd.xlane.f32.xlu0 %v2218
        %v2220 = vpop.xlane.xlu0 %2219
        %v2221 = vsel %vm506, %v2199, 0.0
        %2222 = vadd.xlane.f32.xlu0 %v2221
        %v2223 = vpop.xlane.xlu0 %2222
        %v2224 = vmul.f32 %v2202, %v1726
        %v2225 = vmul.f32 %v2205, %v1726
        %v2226 = vmul.f32 %v2208, %v1726
        %v2227 = vmul.f32 %v2211, %v1726
        %v2228 = vmul.f32 %v2214, %v1726
        %v2229 = vmul.f32 %v2217, %v1726
        %v2230 = vmul.f32 %v2220, %v1726
        %v2231 = vmul.f32 %v2223, %v1726
        %v2232 = vadd.f32 %v2224, 1e-12
        %v2233 = vadd.f32 %v2225, 1e-12
        %v2234 = vadd.f32 %v2226, 1e-12
        %v2235 = vadd.f32 %v2227, 1e-12
        %v2236 = vadd.f32 %v2228, 1e-12
        %v2237 = vadd.f32 %v2229, 1e-12
        %v2238 = vadd.f32 %v2230, 1e-12
        %v2239 = vadd.f32 %v2231, 1e-12
        %v2240 = vrsqrt.pop %v2232
        %v2241 = vrsqrt.pop %v2233
        %v2242 = vrsqrt.pop %v2234
        %v2243 = vrsqrt.pop %v2235
        %v2244 = vrsqrt.pop %v2236
        %v2245 = vrsqrt.pop %v2237
        %v2246 = vrsqrt.pop %v2238
        %v2247 = vrsqrt.pop %v2239
        %v2248 = vmul.f32 %v2184, %v2240
        %v2249 = vmul.f32 %v2185, %v2241
        %v2250 = vmul.f32 %v2186, %v2242
        %v2251 = vmul.f32 %v2187, %v2243
        %v2252 = vmul.f32 %v2188, %v2244
        %v2253 = vmul.f32 %v2189, %v2245
        %v2254 = vmul.f32 %v2190, %v2246
        %v2255 = vmul.f32 %v2191, %v2247
        %v2256 = vlaneseq
        %v2257 = vshrl.u32 %v2256, 7
        %v2258 = vsub.s32 0, %v2257
        %v2259 = vrot.slane %v477, %v2258
        %v2260 = vmul.f32 %v2248, %v2259
        %v2261 = vmul.f32 %v2249, %v2259
        %v2262 = vmul.f32 %v2250, %v2259
        %v2263 = vmul.f32 %v2251, %v2259
        %v2264 = vmul.f32 %v2252, %v2259
        %v2265 = vmul.f32 %v2253, %v2259
        %v2266 = vmul.f32 %v2254, %v2259
        %v2267 = vmul.f32 %v2255, %v2259
        %v2268 = vlaneseq
        %v2269 = vshrl.u32 %v2268, 7
        %v2270 = vsub.s32 0, %v2269
        %v2271 = vrot.slane %v478, %v2270
        %v2272 = vadd.f32 %v2260, %v2271
        %v2273 = vadd.f32 %v2261, %v2271
        %v2274 = vadd.f32 %v2262, %v2271
        %v2275 = vadd.f32 %v2263, %v2271
        %v2276 = vadd.f32 %v2264, %v2271
        %v2277 = vadd.f32 %v2265, %v2271
        %v2278 = vadd.f32 %v2266, %v2271
        %v2279 = vadd.f32 %v2267, %v2271
        %2280 = vst.msk [vmem:[#allocation2] sm:$0xff] %vm506, %v2272
        %2281 = vst.msk [vmem:[#allocation2 + $0x8] sm:$0xff] %vm506, %v2273
        %2282 = vst.msk [vmem:[#allocation2 + $0x10] sm:$0xff] %vm506, %v2274
        %2283 = vst.msk [vmem:[#allocation2 + $0x18] sm:$0xff] %vm506, %v2275
        %2284 = vst.msk [vmem:[#allocation2 + $0x20] sm:$0xff] %vm506, %v2276
        %2285 = vst.msk [vmem:[#allocation2 + $0x28] sm:$0xff] %vm506, %v2277
        %2286 = vst.msk [vmem:[#allocation2 + $0x30] sm:$0xff] %vm506, %v2278
        %2287 = vst.msk [vmem:[#allocation2 + $0x38] sm:$0xff] %vm506, %v2279
        %p2288 = scmp.eq.s32.totalorder %s25, 2
        // Predicated region
        $region57: #{tpu_custom_call.1} parent=51 // pred_check
          %p2289 = pneg %p2288
        $region58: #{tpu_custom_call.1} parent=51 // pred_check_branch
          %2291 = sbr.rel (%p2289) target = $region60
        $region59: #{tpu_custom_call.1} parent=51 // pred_region
          %2292 = vst.msk [vmem:[#allocation3] sm:$0xff] %vm506, %v2272
          %2293 = vst.msk [vmem:[#allocation3 + $0x8] sm:$0xff] %vm506, %v2273
          %s2294 = scalar_lea.vmem [#allocation3], 16
          %2295 = vst.msk [vmem:[%s2294] sm:$0xff] %vm506, %v2274
          %2296 = vst.msk [vmem:[%s2294 + $0x8] sm:$0xff] %vm506, %v2275
          %s2297 = scalar_lea.vmem [#allocation3], 32
          %2298 = vst.msk [vmem:[%s2297] sm:$0xff] %vm506, %v2276
          %2299 = vst.msk [vmem:[%s2297 + $0x8] sm:$0xff] %vm506, %v2277
          %s2300 = scalar_lea.vmem [#allocation3], 48
          %2301 = vst.msk [vmem:[%s2300] sm:$0xff] %vm506, %v2278
          %2302 = vst.msk [vmem:[%s2300 + $0x8] sm:$0xff] %vm506, %v2279
        $region60: #{tpu_custom_call.1} parent=51 // pred_fallthru
          _
        %p2303 = scmp.eq.s32.totalorder %s25, 3
        // Predicated region
        $region61: #{tpu_custom_call.1} parent=51 // pred_check
          %p2304 = pneg %p2303
        $region62: #{tpu_custom_call.1} parent=51 // pred_check_branch
          %2306 = sbr.rel (%p2304) target = $region64
        $region63: #{tpu_custom_call.1} parent=51 // pred_region
          %v2307 = vld [vmem:[#allocation3] sm:$0xff]
          %v2308 = vld [vmem:[#allocation3 + $0x8] sm:$0xff]
          %v2309 = vadd.f32 %v2307, %v2272
          %v2310 = vadd.f32 %v2308, %v2273
          %2311 = vst.msk [vmem:[#allocation3] sm:$0xff] %vm506, %v2309
          %2312 = vst.msk [vmem:[#allocation3 + $0x8] sm:$0xff] %vm506, %v2310
          %s2313 = scalar_lea.vmem [#allocation3], 16
          %v2314 = vld [vmem:[%s2313] sm:$0xff]
          %v2315 = vld [vmem:[%s2313 + $0x8] sm:$0xff]
          %v2316 = vadd.f32 %v2314, %v2274
          %v2317 = vadd.f32 %v2315, %v2275
          %2318 = vst.msk [vmem:[%s2313] sm:$0xff] %vm506, %v2316
          %2319 = vst.msk [vmem:[%s2313 + $0x8] sm:$0xff] %vm506, %v2317
          %s2320 = scalar_lea.vmem [#allocation3], 32
          %v2321 = vld [vmem:[%s2320] sm:$0xff]
          %v2322 = vld [vmem:[%s2320 + $0x8] sm:$0xff]
          %v2323 = vadd.f32 %v2321, %v2276
          %v2324 = vadd.f32 %v2322, %v2277
          %2325 = vst.msk [vmem:[%s2320] sm:$0xff] %vm506, %v2323
          %2326 = vst.msk [vmem:[%s2320 + $0x8] sm:$0xff] %vm506, %v2324
          %s2327 = scalar_lea.vmem [#allocation3], 48
          %v2328 = vld [vmem:[%s2327] sm:$0xff]
          %v2329 = vld [vmem:[%s2327 + $0x8] sm:$0xff]
          %v2330 = vadd.f32 %v2328, %v2278
          %v2331 = vadd.f32 %v2329, %v2279
          %2332 = vst.msk [vmem:[%s2327] sm:$0xff] %vm506, %v2330
          %2333 = vst.msk [vmem:[%s2327 + $0x8] sm:$0xff] %vm506, %v2331
        $region64: #{tpu_custom_call.1} parent=51 // pred_fallthru
          _
        // Predicated region
        $region65: #{tpu_custom_call.1} parent=51 // pred_check
          %p2334 = pneg %p258
        $region66: #{tpu_custom_call.1} parent=51 // pred_check_branch
          %2336 = sbr.rel (%p2334) target = $region68
        $region67: #{tpu_custom_call.1} parent=51 // pred_region
          %s2337 = smul.u32 4, %s24
          %s2339 = ssub.s32 1024, 1024
          %2340 = vsyncadd [#allocation4], %s2339
          %s2341 = smul.addr %s2337, 2
          %s2342 = smul.addr %s2341, 128
          %s2343 = scalar_lea.hbm %s8, %s2342
          %s2344 = sshll.u32 [#allocation3], 4
          %s2345 = int_to_ptr.vmem [resolvable:$true] %s2344
          %2350 = dma.vmem_to_hbm [thread:$0]  %s2345, 1024, %s2343, [#allocation4], 128, 128, 8
        $region68: #{tpu_custom_call.1} parent=51 // pred_fallthru
          _
        // Predicated region
        $region69: #{tpu_custom_call.1} parent=51 // pred_check
          %p2351 = pneg %p258
        $region70: #{tpu_custom_call.1} parent=51 // pred_check_branch
          %2353 = sbr.rel (%p2351) target = $region72
        $region71: #{tpu_custom_call.1} parent=51 // pred_region
          %2354 = dma.done [#allocation4], 1024
        $region72: #{tpu_custom_call.1} parent=51 // pred_fallthru
          _
      $region52: #{tpu_custom_call.1} parent=5 // pred_fallthru
        _
      %p2355 = scmp.le.s32.totalorder 2, %s15
      // Predicated region
      $region73: #{tpu_custom_call.1} parent=5 // pred_check
        %p2356 = pneg %p2355
      $region74: #{tpu_custom_call.1} parent=5 // pred_check_branch
        %2358 = sbr.rel (%p2356) target = $region76
      $region75: #{tpu_custom_call.1} parent=5 // pred_region
        %s2359 = ssub.s32 %s15, 2
      $region76: #{tpu_custom_call.1} parent=5 // pred_fallthru
        _
    $region6: #{tpu_custom_call.1} parent=1 // loop_footer
      %s19 = sadd.s32 1, %s15
    $region7: #{tpu_custom_call.1} parent=1 // loop_footer_branch
      %14 = sbr.rel target = $region3
    $region8: #{tpu_custom_call.1} parent=1 // loop_exit
      _
    %2360 = vsyncpa [#allocation4], 1
    %s2361 = scalar_lea.sflag [#allocation4], 1
    %2362 = vsyncpa %s2361, 1

</llo_original>
